<compile_context>
chip_gen: v7x
topology: tpu7x:2x2x1
jax: 0.10.0
libtpu: 0.0.40
codegen_flags: <defaults>
</compile_context>

<pallas_src>
import jax
import jax.numpy as jnp
from jax import lax
from jax.experimental import pallas as pl
from jax.experimental.pallas import tpu as pltpu


def _round_up(x: int, m: int) -> int:
    return (x + m - 1) // m * m


# ----------------------------------------------------------------------------
# Pallas kernel: whole [T, tile_n, C] block per grid step, T loop in-body.
# ----------------------------------------------------------------------------
def _make_kernel(res: bool, tau: float, v_th: float, T: int):
    inv_tau = 1.0 / tau

    def kernel(x_ref, w1_ref, sc1_ref, b1_ref, w2_ref, sc2_ref, b2_ref,
               out_ref):
        # Hoist loop-invariant operands (broadcasts are not CSE'd by JAX).
        w1 = w1_ref[...]            # (Cin, Chid)  bf16
        w2 = w2_ref[...]            # (Chid, Cout) bf16
        sc1 = sc1_ref[...]          # (1, Chid)    f32 (BN folded scale)
        b1 = b1_ref[...]            # (1, Chid)    f32 (conv bias folded thru BN)
        sc2 = sc2_ref[...]          # (1, Cout)
        b2 = b2_ref[...]            # (1, Cout)

        tile_n = x_ref.shape[1]
        cin = x_ref.shape[2]
        chid = w1_ref.shape[1]

        def step(t, carry):
            v1, v2 = carry
            x = x_ref[t]                        # (tile_n, Cin) f32
            identity = x

            # ---- LIF 1: v = v + (x - v)/tau ; spike = (v >= v_th) ; hard reset
            v1 = v1 + (x - v1) * inv_tau
            fire1 = v1 >= v_th
            spike1 = fire1.astype(jnp.float32)
            v1 = jnp.where(fire1, 0.0, v1)

            # ---- fc1 (1x1 conv == channel matmul on MXU) + folded BN
            h = jnp.dot(spike1.astype(jnp.bfloat16), w1,
                        preferred_element_type=jnp.float32)
            h = h * sc1 + b1
            if res:
                h = identity + h
                identity = h

            # ---- LIF 2
            v2 = v2 + (h - v2) * inv_tau
            fire2 = v2 >= v_th
            spike2 = fire2.astype(jnp.float32)
            v2 = jnp.where(fire2, 0.0, v2)

            # ---- fc2 + folded BN + residual
            o = jnp.dot(spike2.astype(jnp.bfloat16), w2,
                        preferred_element_type=jnp.float32)
            out_ref[t] = o * sc2 + b2 + identity
            return (v1, v2)

        lax.fori_loop(
            0, T, step,
            (jnp.zeros((tile_n, cin), jnp.float32),    # LIF1 membrane
             jnp.zeros((tile_n, chid), jnp.float32)),  # LIF2 membrane
            unroll=True)

    return kernel


# ----------------------------------------------------------------------------
# Wrapper: channel padding to 128, pixel tiling, VMEM budgeting.
# ----------------------------------------------------------------------------
def ms_mlp_conv_pallas(x_tnc, w1, sc1, b1, w2, sc2, b2,
                       *, res: bool, tau: float = 2.0, v_th: float = 1.0,
                       tile_n: int = 512):
    """x_tnc: [T, N, C_in] float32.  Returns [T, N, C_out] float32."""
    T, N, Cin = x_tnc.shape
    Chid = w1.shape[1]
    Cout = w2.shape[1]

    # Module semantics: the residual adds require these to hold.
    assert Cout == Cin, "final residual requires out_features == in_features"
    if res:
        assert Chid == Cin, "res branch requires hidden_features == in_features"

    # Lane-dense channel padding (zeros everywhere so padded lanes stay zero:
    # padded inputs never spike, padded weight/scale/bias columns are zero).
    cpad_in = _round_up(Cin, 128)
    cpad_hid = _round_up(Chid, 128)
    cpad_out = _round_up(Cout, 128)

    # --- pick pixel-tile size against a VMEM budget (double-buffered in+out)
    vmem_budget = 40 * 1024 * 1024
    tile = min(tile_n, _round_up(N, 8))
    tile = max(8, (tile // 8) * 8)
    while tile > 8 and 2 * 4 * T * tile * (cpad_in + cpad_out) > vmem_budget:
        tile = max(8, (tile // 2 // 8) * 8)
    # Give both v7x TensorCores work when N is small.
    if _round_up(N, tile) // tile < 2 and tile >= 16:
        tile = max(8, _round_up((N + 1) // 2, 8))
    n_pad = _round_up(N, tile)

    # --- zero-padded operands (weights in bf16 for the MXU)
    xp = jnp.zeros((T, n_pad, cpad_in), jnp.float32
                   ).at[:, :N, :Cin].set(x_tnc.astype(jnp.float32))
    w1p = jnp.zeros((cpad_in, cpad_hid), jnp.bfloat16
                    ).at[:Cin, :Chid].set(w1.astype(jnp.bfloat16))
    w2p = jnp.zeros((cpad_hid, cpad_out), jnp.bfloat16
                    ).at[:Chid, :Cout].set(w2.astype(jnp.bfloat16))
    sc1p = jnp.zeros((1, cpad_hid), jnp.float32).at[:, :Chid].set(sc1.reshape(1, -1))
    b1p = jnp.zeros((1, cpad_hid), jnp.float32).at[:, :Chid].set(b1.reshape(1, -1))
    sc2p = jnp.zeros((1, cpad_out), jnp.float32).at[:, :Cout].set(sc2.reshape(1, -1))
    b2p = jnp.zeros((1, cpad_out), jnp.float32).at[:, :Cout].set(b2.reshape(1, -1))

    # --- cost estimate + explicit VMEM limit
    flops = 2 * T * n_pad * (cpad_in * cpad_hid + cpad_hid * cpad_out)
    bytes_accessed = ((T * n_pad * (cpad_in + cpad_out)) * 4
                      + (w1p.size + w2p.size) * 2
                      + (sc1p.size + b1p.size + sc2p.size + b2p.size) * 4)
    block_bytes = 2 * 4 * T * tile * (cpad_in + cpad_out)       # dbl-buffered in/out
    weight_bytes = 2 * 2 * (w1p.size + w2p.size)
    live_bytes = 4 * 4 * tile * (cpad_in + cpad_hid)            # membranes + temps
    est = block_bytes + weight_bytes + live_bytes
    vmem_limit = int(min(48 * 1024 * 1024, max(16 * 1024 * 1024, 2 * est)))

    kernel = _make_kernel(res, tau, v_th, T)

    out = pl.pallas_call(
        kernel,
        out_shape=jax.ShapeDtypeStruct((T, n_pad, cpad_out), jnp.float32),
        grid_spec=pltpu.PrefetchScalarGridSpec(
            num_scalar_prefetch=0,
            grid=(n_pad // tile,),                   # pure pixel-tile axis
            in_specs=[
                pl.BlockSpec((T, tile, cpad_in), lambda n: (0, n, 0)),
                pl.BlockSpec((cpad_in, cpad_hid), lambda n: (0, 0)),
                pl.BlockSpec((1, cpad_hid), lambda n: (0, 0)),
                pl.BlockSpec((1, cpad_hid), lambda n: (0, 0)),
                pl.BlockSpec((cpad_hid, cpad_out), lambda n: (0, 0)),
                pl.BlockSpec((1, cpad_out), lambda n: (0, 0)),
                pl.BlockSpec((1, cpad_out), lambda n: (0, 0)),
            ],
            out_specs=pl.BlockSpec((T, tile, cpad_out), lambda n: (0, n, 0)),
        ),
        compiler_params=pltpu.CompilerParams(
            dimension_semantics=("parallel",),
            vmem_limit_bytes=vmem_limit),
        cost_estimate=pl.CostEstimate(flops=flops, transcendentals=0,
                                      bytes_accessed=bytes_accessed),
    )(xp, w1p, sc1p, b1p, w2p, sc2p, b2p)

    return out[:, :N, :Cout]


# ----------------------------------------------------------------------------
# Pure-JAX reference (mirrors the kernel's bf16-MXU / f32-VPU precision)
# ----------------------------------------------------------------------------
def _lif_ref(x, tau=2.0, v_th=1.0):
    inv_tau = 1.0 / tau

    def step(v, xt):
        v = v + (xt - v) * inv_tau
        fire = v >= v_th
        s = fire.astype(jnp.float32)
        v = jnp.where(fire, 0.0, v)
        return v, s

    _, spikes = lax.scan(step, jnp.zeros_like(x[0]), x)
    return spikes


def ms_mlp_conv_ref(x, w1, sc1, b1, w2, sc2, b2, *, res):
    w1b = w1.astype(jnp.bfloat16)
    w2b = w2.astype(jnp.bfloat16)
    identity = x
    s1 = _lif_ref(x).astype(jnp.bfloat16)
    h = jnp.einsum('tnc,cd->tnd', s1, w1b,
                   preferred_element_type=jnp.float32) * sc1 + b1
    if res:
        h = identity + h
        identity = h
    s2 = _lif_ref(h).astype(jnp.bfloat16)
    o = jnp.einsum('tnc,cd->tnd', s2, w2b,
                   preferred_element_type=jnp.float32) * sc2 + b2
    return o + identity


# ----------------------------------------------------------------------------
# Parameter construction (deterministic, synthetic; BN folded for inference)
# ----------------------------------------------------------------------------
def make_params(key, c_in, c_hid, c_out):
    ks = jax.random.split(key, 10)
    w1 = jax.random.normal(ks[0], (c_in, c_hid), jnp.float32) * (1.0 / jnp.sqrt(c_in))
    cb1 = jax.random.normal(ks[1], (c_hid,), jnp.float32) * 0.1
    w2 = jax.random.normal(ks[2], (c_hid, c_out), jnp.float32) * (1.0 / jnp.sqrt(c_hid))
    cb2 = jax.random.normal(ks[3], (c_out,), jnp.float32) * 0.1
    eps = 1e-5
    g1 = 1.0 + 0.1 * jax.random.normal(ks[4], (c_hid,), jnp.float32)
    be1 = 0.1 * jax.random.normal(ks[5], (c_hid,), jnp.float32)
    m1 = 0.1 * jax.random.normal(ks[6], (c_hid,), jnp.float32)
    var1 = 1.0 + 0.1 * jax.random.uniform(ks[6], (c_hid,), jnp.float32)
    g2 = 1.0 + 0.1 * jax.random.normal(ks[7], (c_out,), jnp.float32)
    be2 = 0.1 * jax.random.normal(ks[8], (c_out,), jnp.float32)
    m2 = 0.1 * jax.random.normal(ks[9], (c_out,), jnp.float32)
    var2 = 1.0 + 0.1 * jax.random.uniform(ks[9], (c_out,), jnp.float32)

    sc1 = g1 / jnp.sqrt(var1 + eps)
    b1 = be1 + (cb1 - m1) * sc1
    sc2 = g2 / jnp.sqrt(var2 + eps)
    b2 = be2 + (cb2 - m2) * sc2

    return (w1, sc1.reshape(1, -1), b1.reshape(1, -1),
            w2, sc2.reshape(1, -1), b2.reshape(1, -1))


if __name__ == "__main__":
    # Small shapes consistent with the module (multi-step spiking input).
    T, B, C, H, W = 4, 2, 16, 8, 8
    in_features = C
    hidden_features = C          # == in_features -> residual branch enabled
    out_features = C
    res = (in_features == hidden_features)

    key = jax.random.PRNGKey(0)
    kx, kp = jax.random.split(key)
    x_nchw = 2.0 * jax.random.normal(kx, (T, B, C, H, W), jnp.float32)

    w1, sc1, b1, w2, sc2, b2 = make_params(kp, in_features, hidden_features,
                                           out_features)

    # [T, B, C, H, W] -> [T, B, H, W, C] -> [T, N, C]
    N = B * H * W
    x_tnc = jnp.transpose(x_nchw, (0, 1, 3, 4, 2)).reshape(T, N, in_features)

    out_tnc = ms_mlp_conv_pallas(x_tnc, w1, sc1, b1, w2, sc2, b2, res=res)
    out_tnc = jax.block_until_ready(out_tnc)

    # Back to the PyTorch layout [T, B, C, H, W]
    out_nchw = jnp.transpose(out_tnc.reshape(T, B, H, W, out_features),
                             (0, 1, 4, 2, 3))

    ref = ms_mlp_conv_ref(x_tnc, w1, sc1, b1, w2, sc2, b2, res=res)
    assert out_nchw.shape == (T, B, out_features, H, W)
    assert jnp.allclose(out_tnc, ref, rtol=1e-3, atol=1e-3), "mismatch vs reference"

    # TODO(synk): training-mode BatchNorm (batch statistics) and the LIF
    # surrogate-gradient / detach_reset backward behavior are not modeled;
    # this kernel implements the inference forward pass with folded BN.

    print("KERNEL_OK")
</pallas_src>

<mosaic_0001>
module attributes {stable_mosaic.version = 11 : i64} {
  func.func @kernel(%arg0: i32, %arg1: memref<4x64x128xf32, #tpu.memory_space<vmem>>, %arg2: memref<128x128xbf16, #tpu.memory_space<vmem>>, %arg3: memref<1x128xf32, #tpu.memory_space<vmem>>, %arg4: memref<1x128xf32, #tpu.memory_space<vmem>>, %arg5: memref<128x128xbf16, #tpu.memory_space<vmem>>, %arg6: memref<1x128xf32, #tpu.memory_space<vmem>>, %arg7: memref<1x128xf32, #tpu.memory_space<vmem>>, %arg8: memref<4x64x128xf32, #tpu.memory_space<vmem>>) attributes {dimension_semantics = [#tpu.dimension_semantics<parallel>], iteration_bounds = array<i64: 2>, scalar_prefetch = 0 : i64, scratch_operands = 0 : i64, tpu.core_type = #tpu.core_type<tc>, window_params = [{transform_indices = @transform_0, window_bounds = array<i64: 4, 64, 128>}, {pipeline_mode = #tpu.pipeline_mode<synchronous>, transform_indices = @transform_1, window_bounds = array<i64: 128, 128>}, {pipeline_mode = #tpu.pipeline_mode<synchronous>, transform_indices = @transform_2, window_bounds = array<i64: 1, 128>}, {pipeline_mode = #tpu.pipeline_mode<synchronous>, transform_indices = @transform_3, window_bounds = array<i64: 1, 128>}, {pipeline_mode = #tpu.pipeline_mode<synchronous>, transform_indices = @transform_4, window_bounds = array<i64: 128, 128>}, {pipeline_mode = #tpu.pipeline_mode<synchronous>, transform_indices = @transform_5, window_bounds = array<i64: 1, 128>}, {pipeline_mode = #tpu.pipeline_mode<synchronous>, transform_indices = @transform_6, window_bounds = array<i64: 1, 128>}, {transform_indices = @transform_7, window_bounds = array<i64: 4, 64, 128>}]} {
    %c0 = arith.constant 0 : index
    %c0_0 = arith.constant 0 : index
    %0 = vector.load %arg2[%c0, %c0_0] : memref<128x128xbf16, #tpu.memory_space<vmem>>, vector<128x128xbf16>
    %c0_1 = arith.constant 0 : index
    %c0_2 = arith.constant 0 : index
    %1 = vector.load %arg5[%c0_1, %c0_2] : memref<128x128xbf16, #tpu.memory_space<vmem>>, vector<128x128xbf16>
    %c0_3 = arith.constant 0 : index
    %c0_4 = arith.constant 0 : index
    %2 = vector.load %arg3[%c0_3, %c0_4] : memref<1x128xf32, #tpu.memory_space<vmem>>, vector<1x128xf32>
    %c0_5 = arith.constant 0 : index
    %c0_6 = arith.constant 0 : index
    %3 = vector.load %arg4[%c0_5, %c0_6] : memref<1x128xf32, #tpu.memory_space<vmem>>, vector<1x128xf32>
    %c0_7 = arith.constant 0 : index
    %c0_8 = arith.constant 0 : index
    %4 = vector.load %arg6[%c0_7, %c0_8] : memref<1x128xf32, #tpu.memory_space<vmem>>, vector<1x128xf32>
    %c0_9 = arith.constant 0 : index
    %c0_10 = arith.constant 0 : index
    %5 = vector.load %arg7[%c0_9, %c0_10] : memref<1x128xf32, #tpu.memory_space<vmem>>, vector<1x128xf32>
    %cst = arith.constant 0.000000e+00 : f32
    %6 = vector.broadcast %cst : f32 to vector<64x128xf32>
    %cst_11 = arith.constant 0.000000e+00 : f32
    %7 = vector.broadcast %cst_11 : f32 to vector<64x128xf32>
    %c0_i32 = arith.constant 0 : i32
    %8 = arith.index_cast %c0_i32 : i32 to index
    %c0_12 = arith.constant 0 : index
    %c0_13 = arith.constant 0 : index
    %9 = vector.load %arg1[%8, %c0_12, %c0_13] : memref<4x64x128xf32, #tpu.memory_space<vmem>>, vector<1x64x128xf32>
    %10 = vector.shape_cast %9 : vector<1x64x128xf32> to vector<64x128xf32>
    %11 = arith.subf %10, %6 : vector<64x128xf32>
    %cst_14 = arith.constant 5.000000e-01 : f32
    %12 = vector.broadcast %cst_14 : f32 to vector<64x128xf32>
    %13 = arith.mulf %11, %12 : vector<64x128xf32>
    %14 = arith.addf %6, %13 : vector<64x128xf32>
    %cst_15 = arith.constant 1.000000e+00 : f32
    %15 = vector.broadcast %cst_15 : f32 to vector<64x128xf32>
    %16 = arith.cmpf oge, %14, %15 : vector<64x128xf32>
    %17 = arith.extui %16 : vector<64x128xi1> to vector<64x128xi32>
    %18 = arith.sitofp %17 : vector<64x128xi32> to vector<64x128xf32>
    %cst_16 = arith.constant 0.000000e+00 : f32
    %19 = vector.broadcast %cst_16 : f32 to vector<64x128xf32>
    %20 = arith.select %16, %19, %14 : vector<64x128xi1>, vector<64x128xf32>
    %21 = arith.truncf %18 : vector<64x128xf32> to vector<64x128xbf16>
    %cst_17 = arith.constant dense<0.000000e+00> : vector<64x128xf32>
    %22 = tpu.matmul %21, %0, %cst_17 {dimension_numbers = #tpu.dot_dimension_numbers<[1], [0], [0], [1], [0, 0, 1, 1], [], []>} : vector<64x128xbf16>, vector<128x128xbf16>, vector<64x128xf32> -> vector<64x128xf32>
    %23 = vector.broadcast %2 : vector<1x128xf32> to vector<64x128xf32>
    %24 = arith.mulf %22, %23 : vector<64x128xf32>
    %25 = vector.broadcast %3 : vector<1x128xf32> to vector<64x128xf32>
    %26 = arith.addf %24, %25 : vector<64x128xf32>
    %27 = arith.addf %10, %26 : vector<64x128xf32>
    %28 = arith.subf %27, %7 : vector<64x128xf32>
    %cst_18 = arith.constant 5.000000e-01 : f32
    %29 = vector.broadcast %cst_18 : f32 to vector<64x128xf32>
    %30 = arith.mulf %28, %29 : vector<64x128xf32>
    %31 = arith.addf %7, %30 : vector<64x128xf32>
    %cst_19 = arith.constant 1.000000e+00 : f32
    %32 = vector.broadcast %cst_19 : f32 to vector<64x128xf32>
    %33 = arith.cmpf oge, %31, %32 : vector<64x128xf32>
    %34 = arith.extui %33 : vector<64x128xi1> to vector<64x128xi32>
    %35 = arith.sitofp %34 : vector<64x128xi32> to vector<64x128xf32>
    %cst_20 = arith.constant 0.000000e+00 : f32
    %36 = vector.broadcast %cst_20 : f32 to vector<64x128xf32>
    %37 = arith.select %33, %36, %31 : vector<64x128xi1>, vector<64x128xf32>
    %38 = arith.truncf %35 : vector<64x128xf32> to vector<64x128xbf16>
    %cst_21 = arith.constant dense<0.000000e+00> : vector<64x128xf32>
    %39 = tpu.matmul %38, %1, %cst_21 {dimension_numbers = #tpu.dot_dimension_numbers<[1], [0], [0], [1], [0, 0, 1, 1], [], []>} : vector<64x128xbf16>, vector<128x128xbf16>, vector<64x128xf32> -> vector<64x128xf32>
    %40 = vector.broadcast %4 : vector<1x128xf32> to vector<64x128xf32>
    %41 = arith.mulf %39, %40 : vector<64x128xf32>
    %42 = vector.broadcast %5 : vector<1x128xf32> to vector<64x128xf32>
    %43 = arith.addf %41, %42 : vector<64x128xf32>
    %44 = arith.addf %43, %27 : vector<64x128xf32>
    %45 = arith.index_cast %c0_i32 : i32 to index
    %c0_22 = arith.constant 0 : index
    %c0_23 = arith.constant 0 : index
    %46 = vector.load %arg8[%45, %c0_22, %c0_23] : memref<4x64x128xf32, #tpu.memory_space<vmem>>, vector<1x64x128xf32>
    %47 = vector.shape_cast %46 : vector<1x64x128xf32> to vector<64x128xf32>
    %48 = vector.shape_cast %44 : vector<64x128xf32> to vector<1x64x128xf32>
    tpu.vector_store %arg8[%45, %c0_22, %c0_23], %48 {strides = array<i32>} : memref<4x64x128xf32, #tpu.memory_space<vmem>>, vector<1x64x128xf32>,
    %c1_i32 = arith.constant 1 : i32
    %49 = arith.index_cast %c1_i32 : i32 to index
    %c0_24 = arith.constant 0 : index
    %c0_25 = arith.constant 0 : index
    %50 = vector.load %arg1[%49, %c0_24, %c0_25] : memref<4x64x128xf32, #tpu.memory_space<vmem>>, vector<1x64x128xf32>
    %51 = vector.shape_cast %50 : vector<1x64x128xf32> to vector<64x128xf32>
    %52 = arith.subf %51, %20 : vector<64x128xf32>
    %cst_26 = arith.constant 5.000000e-01 : f32
    %53 = vector.broadcast %cst_26 : f32 to vector<64x128xf32>
    %54 = arith.mulf %52, %53 : vector<64x128xf32>
    %55 = arith.addf %20, %54 : vector<64x128xf32>
    %cst_27 = arith.constant 1.000000e+00 : f32
    %56 = vector.broadcast %cst_27 : f32 to vector<64x128xf32>
    %57 = arith.cmpf oge, %55, %56 : vector<64x128xf32>
    %58 = arith.extui %57 : vector<64x128xi1> to vector<64x128xi32>
    %59 = arith.sitofp %58 : vector<64x128xi32> to vector<64x128xf32>
    %cst_28 = arith.constant 0.000000e+00 : f32
    %60 = vector.broadcast %cst_28 : f32 to vector<64x128xf32>
    %61 = arith.select %57, %60, %55 : vector<64x128xi1>, vector<64x128xf32>
    %62 = arith.truncf %59 : vector<64x128xf32> to vector<64x128xbf16>
    %cst_29 = arith.constant dense<0.000000e+00> : vector<64x128xf32>
    %63 = tpu.matmul %62, %0, %cst_29 {dimension_numbers = #tpu.dot_dimension_numbers<[1], [0], [0], [1], [0, 0, 1, 1], [], []>} : vector<64x128xbf16>, vector<128x128xbf16>, vector<64x128xf32> -> vector<64x128xf32>
    %64 = vector.broadcast %2 : vector<1x128xf32> to vector<64x128xf32>
    %65 = arith.mulf %63, %64 : vector<64x128xf32>
    %66 = vector.broadcast %3 : vector<1x128xf32> to vector<64x128xf32>
    %67 = arith.addf %65, %66 : vector<64x128xf32>
    %68 = arith.addf %51, %67 : vector<64x128xf32>
    %69 = arith.subf %68, %37 : vector<64x128xf32>
    %cst_30 = arith.constant 5.000000e-01 : f32
    %70 = vector.broadcast %cst_30 : f32 to vector<64x128xf32>
    %71 = arith.mulf %69, %70 : vector<64x128xf32>
    %72 = arith.addf %37, %71 : vector<64x128xf32>
    %cst_31 = arith.constant 1.000000e+00 : f32
    %73 = vector.broadcast %cst_31 : f32 to vector<64x128xf32>
    %74 = arith.cmpf oge, %72, %73 : vector<64x128xf32>
    %75 = arith.extui %74 : vector<64x128xi1> to vector<64x128xi32>
    %76 = arith.sitofp %75 : vector<64x128xi32> to vector<64x128xf32>
    %cst_32 = arith.constant 0.000000e+00 : f32
    %77 = vector.broadcast %cst_32 : f32 to vector<64x128xf32>
    %78 = arith.select %74, %77, %72 : vector<64x128xi1>, vector<64x128xf32>
    %79 = arith.truncf %76 : vector<64x128xf32> to vector<64x128xbf16>
    %cst_33 = arith.constant dense<0.000000e+00> : vector<64x128xf32>
    %80 = tpu.matmul %79, %1, %cst_33 {dimension_numbers = #tpu.dot_dimension_numbers<[1], [0], [0], [1], [0, 0, 1, 1], [], []>} : vector<64x128xbf16>, vector<128x128xbf16>, vector<64x128xf32> -> vector<64x128xf32>
    %81 = vector.broadcast %4 : vector<1x128xf32> to vector<64x128xf32>
    %82 = arith.mulf %80, %81 : vector<64x128xf32>
    %83 = vector.broadcast %5 : vector<1x128xf32> to vector<64x128xf32>
    %84 = arith.addf %82, %83 : vector<64x128xf32>
    %85 = arith.addf %84, %68 : vector<64x128xf32>
    %86 = arith.index_cast %c1_i32 : i32 to index
    %c0_34 = arith.constant 0 : index
    %c0_35 = arith.constant 0 : index
    %87 = vector.load %arg8[%86, %c0_34, %c0_35] : memref<4x64x128xf32, #tpu.memory_space<vmem>>, vector<1x64x128xf32>
    %88 = vector.shape_cast %87 : vector<1x64x128xf32> to vector<64x128xf32>
    %89 = vector.shape_cast %85 : vector<64x128xf32> to vector<1x64x128xf32>
    tpu.vector_store %arg8[%86, %c0_34, %c0_35], %89 {strides = array<i32>} : memref<4x64x128xf32, #tpu.memory_space<vmem>>, vector<1x64x128xf32>,
    %c2_i32 = arith.constant 2 : i32
    %90 = arith.index_cast %c2_i32 : i32 to index
    %c0_36 = arith.constant 0 : index
    %c0_37 = arith.constant 0 : index
    %91 = vector.load %arg1[%90, %c0_36, %c0_37] : memref<4x64x128xf32, #tpu.memory_space<vmem>>, vector<1x64x128xf32>
    %92 = vector.shape_cast %91 : vector<1x64x128xf32> to vector<64x128xf32>
    %93 = arith.subf %92, %61 : vector<64x128xf32>
    %cst_38 = arith.constant 5.000000e-01 : f32
    %94 = vector.broadcast %cst_38 : f32 to vector<64x128xf32>
    %95 = arith.mulf %93, %94 : vector<64x128xf32>
    %96 = arith.addf %61, %95 : vector<64x128xf32>
    %cst_39 = arith.constant 1.000000e+00 : f32
    %97 = vector.broadcast %cst_39 : f32 to vector<64x128xf32>
    %98 = arith.cmpf oge, %96, %97 : vector<64x128xf32>
    %99 = arith.extui %98 : vector<64x128xi1> to vector<64x128xi32>
    %100 = arith.sitofp %99 : vector<64x128xi32> to vector<64x128xf32>
    %cst_40 = arith.constant 0.000000e+00 : f32
    %101 = vector.broadcast %cst_40 : f32 to vector<64x128xf32>
    %102 = arith.select %98, %101, %96 : vector<64x128xi1>, vector<64x128xf32>
    %103 = arith.truncf %100 : vector<64x128xf32> to vector<64x128xbf16>
    %cst_41 = arith.constant dense<0.000000e+00> : vector<64x128xf32>
    %104 = tpu.matmul %103, %0, %cst_41 {dimension_numbers = #tpu.dot_dimension_numbers<[1], [0], [0], [1], [0, 0, 1, 1], [], []>} : vector<64x128xbf16>, vector<128x128xbf16>, vector<64x128xf32> -> vector<64x128xf32>
    %105 = vector.broadcast %2 : vector<1x128xf32> to vector<64x128xf32>
    %106 = arith.mulf %104, %105 : vector<64x128xf32>
    %107 = vector.broadcast %3 : vector<1x128xf32> to vector<64x128xf32>
    %108 = arith.addf %106, %107 : vector<64x128xf32>
    %109 = arith.addf %92, %108 : vector<64x128xf32>
    %110 = arith.subf %109, %78 : vector<64x128xf32>
    %cst_42 = arith.constant 5.000000e-01 : f32
    %111 = vector.broadcast %cst_42 : f32 to vector<64x128xf32>
    %112 = arith.mulf %110, %111 : vector<64x128xf32>
    %113 = arith.addf %78, %112 : vector<64x128xf32>
    %cst_43 = arith.constant 1.000000e+00 : f32
    %114 = vector.broadcast %cst_43 : f32 to vector<64x128xf32>
    %115 = arith.cmpf oge, %113, %114 : vector<64x128xf32>
    %116 = arith.extui %115 : vector<64x128xi1> to vector<64x128xi32>
    %117 = arith.sitofp %116 : vector<64x128xi32> to vector<64x128xf32>
    %cst_44 = arith.constant 0.000000e+00 : f32
    %118 = vector.broadcast %cst_44 : f32 to vector<64x128xf32>
    %119 = arith.select %115, %118, %113 : vector<64x128xi1>, vector<64x128xf32>
    %120 = arith.truncf %117 : vector<64x128xf32> to vector<64x128xbf16>
    %cst_45 = arith.constant dense<0.000000e+00> : vector<64x128xf32>
    %121 = tpu.matmul %120, %1, %cst_45 {dimension_numbers = #tpu.dot_dimension_numbers<[1], [0], [0], [1], [0, 0, 1, 1], [], []>} : vector<64x128xbf16>, vector<128x128xbf16>, vector<64x128xf32> -> vector<64x128xf32>
    %122 = vector.broadcast %4 : vector<1x128xf32> to vector<64x128xf32>
    %123 = arith.mulf %121, %122 : vector<64x128xf32>
    %124 = vector.broadcast %5 : vector<1x128xf32> to vector<64x128xf32>
    %125 = arith.addf %123, %124 : vector<64x128xf32>
    %126 = arith.addf %125, %109 : vector<64x128xf32>
    %127 = arith.index_cast %c2_i32 : i32 to index
    %c0_46 = arith.constant 0 : index
    %c0_47 = arith.constant 0 : index
    %128 = vector.load %arg8[%127, %c0_46, %c0_47] : memref<4x64x128xf32, #tpu.memory_space<vmem>>, vector<1x64x128xf32>
    %129 = vector.shape_cast %128 : vector<1x64x128xf32> to vector<64x128xf32>
    %130 = vector.shape_cast %126 : vector<64x128xf32> to vector<1x64x128xf32>
    tpu.vector_store %arg8[%127, %c0_46, %c0_47], %130 {strides = array<i32>} : memref<4x64x128xf32, #tpu.memory_space<vmem>>, vector<1x64x128xf32>,
    %c3_i32 = arith.constant 3 : i32
    %131 = arith.index_cast %c3_i32 : i32 to index
    %c0_48 = arith.constant 0 : index
    %c0_49 = arith.constant 0 : index
    %132 = vector.load %arg1[%131, %c0_48, %c0_49] : memref<4x64x128xf32, #tpu.memory_space<vmem>>, vector<1x64x128xf32>
    %133 = vector.shape_cast %132 : vector<1x64x128xf32> to vector<64x128xf32>
    %134 = arith.subf %133, %102 : vector<64x128xf32>
    %cst_50 = arith.constant 5.000000e-01 : f32
    %135 = vector.broadcast %cst_50 : f32 to vector<64x128xf32>
    %136 = arith.mulf %134, %135 : vector<64x128xf32>
    %137 = arith.addf %102, %136 : vector<64x128xf32>
    %cst_51 = arith.constant 1.000000e+00 : f32
    %138 = vector.broadcast %cst_51 : f32 to vector<64x128xf32>
    %139 = arith.cmpf oge, %137, %138 : vector<64x128xf32>
    %140 = arith.extui %139 : vector<64x128xi1> to vector<64x128xi32>
    %141 = arith.sitofp %140 : vector<64x128xi32> to vector<64x128xf32>
    %cst_52 = arith.constant 0.000000e+00 : f32
    %142 = vector.broadcast %cst_52 : f32 to vector<64x128xf32>
    %143 = arith.select %139, %142, %137 : vector<64x128xi1>, vector<64x128xf32>
    %144 = arith.truncf %141 : vector<64x128xf32> to vector<64x128xbf16>
    %cst_53 = arith.constant dense<0.000000e+00> : vector<64x128xf32>
    %145 = tpu.matmul %144, %0, %cst_53 {dimension_numbers = #tpu.dot_dimension_numbers<[1], [0], [0], [1], [0, 0, 1, 1], [], []>} : vector<64x128xbf16>, vector<128x128xbf16>, vector<64x128xf32> -> vector<64x128xf32>
    %146 = vector.broadcast %2 : vector<1x128xf32> to vector<64x128xf32>
    %147 = arith.mulf %145, %146 : vector<64x128xf32>
    %148 = vector.broadcast %3 : vector<1x128xf32> to vector<64x128xf32>
    %149 = arith.addf %147, %148 : vector<64x128xf32>
    %150 = arith.addf %133, %149 : vector<64x128xf32>
    %151 = arith.subf %150, %119 : vector<64x128xf32>
    %cst_54 = arith.constant 5.000000e-01 : f32
    %152 = vector.broadcast %cst_54 : f32 to vector<64x128xf32>
    %153 = arith.mulf %151, %152 : vector<64x128xf32>
    %154 = arith.addf %119, %153 : vector<64x128xf32>
    %cst_55 = arith.constant 1.000000e+00 : f32
    %155 = vector.broadcast %cst_55 : f32 to vector<64x128xf32>
    %156 = arith.cmpf oge, %154, %155 : vector<64x128xf32>
    %157 = arith.extui %156 : vector<64x128xi1> to vector<64x128xi32>
    %158 = arith.sitofp %157 : vector<64x128xi32> to vector<64x128xf32>
    %cst_56 = arith.constant 0.000000e+00 : f32
    %159 = vector.broadcast %cst_56 : f32 to vector<64x128xf32>
    %160 = arith.select %156, %159, %154 : vector<64x128xi1>, vector<64x128xf32>
    %161 = arith.truncf %158 : vector<64x128xf32> to vector<64x128xbf16>
    %cst_57 = arith.constant dense<0.000000e+00> : vector<64x128xf32>
    %162 = tpu.matmul %161, %1, %cst_57 {dimension_numbers = #tpu.dot_dimension_numbers<[1], [0], [0], [1], [0, 0, 1, 1], [], []>} : vector<64x128xbf16>, vector<128x128xbf16>, vector<64x128xf32> -> vector<64x128xf32>
    %163 = vector.broadcast %4 : vector<1x128xf32> to vector<64x128xf32>
    %164 = arith.mulf %162, %163 : vector<64x128xf32>
    %165 = vector.broadcast %5 : vector<1x128xf32> to vector<64x128xf32>
    %166 = arith.addf %164, %165 : vector<64x128xf32>
    %167 = arith.addf %166, %150 : vector<64x128xf32>
    %168 = arith.index_cast %c3_i32 : i32 to index
    %c0_58 = arith.constant 0 : index
    %c0_59 = arith.constant 0 : index
    %169 = vector.load %arg8[%168, %c0_58, %c0_59] : memref<4x64x128xf32, #tpu.memory_space<vmem>>, vector<1x64x128xf32>
    %170 = vector.shape_cast %169 : vector<1x64x128xf32> to vector<64x128xf32>
    %171 = vector.shape_cast %167 : vector<64x128xf32> to vector<1x64x128xf32>
    tpu.vector_store %arg8[%168, %c0_58, %c0_59], %171 {strides = array<i32>} : memref<4x64x128xf32, #tpu.memory_space<vmem>>, vector<1x64x128xf32>,
    %c4_i32 = arith.constant 4 : i32
    return
  }
  func.func @transform_0(%arg0: i32) -> (i32, i32, i32) {
    %c0_i32 = arith.constant 0 : i32
    %c0_i32_0 = arith.constant 0 : i32
    %c0_i32_1 = arith.constant 0 : i32
    return %c0_i32, %arg0, %c0_i32_0 : i32, i32, i32
  }
  func.func @transform_1(%arg0: i32) -> (i32, i32) {
    %c0_i32 = arith.constant 0 : i32
    %c0_i32_0 = arith.constant 0 : i32
    %c0_i32_1 = arith.constant 0 : i32
    return %c0_i32, %c0_i32_0 : i32, i32
  }
  func.func @transform_2(%arg0: i32) -> (i32, i32) {
    %c0_i32 = arith.constant 0 : i32
    %c0_i32_0 = arith.constant 0 : i32
    %c0_i32_1 = arith.constant 0 : i32
    return %c0_i32, %c0_i32_0 : i32, i32
  }
  func.func @transform_3(%arg0: i32) -> (i32, i32) {
    %c0_i32 = arith.constant 0 : i32
    %c0_i32_0 = arith.constant 0 : i32
    %c0_i32_1 = arith.constant 0 : i32
    return %c0_i32, %c0_i32_0 : i32, i32
  }
  func.func @transform_4(%arg0: i32) -> (i32, i32) {
    %c0_i32 = arith.constant 0 : i32
    %c0_i32_0 = arith.constant 0 : i32
    %c0_i32_1 = arith.constant 0 : i32
    return %c0_i32, %c0_i32_0 : i32, i32
  }
  func.func @transform_5(%arg0: i32) -> (i32, i32) {
    %c0_i32 = arith.constant 0 : i32
    %c0_i32_0 = arith.constant 0 : i32
    %c0_i32_1 = arith.constant 0 : i32
    return %c0_i32, %c0_i32_0 : i32, i32
  }
  func.func @transform_6(%arg0: i32) -> (i32, i32) {
    %c0_i32 = arith.constant 0 : i32
    %c0_i32_0 = arith.constant 0 : i32
    %c0_i32_1 = arith.constant 0 : i32
    return %c0_i32, %c0_i32_0 : i32, i32
  }
  func.func @transform_7(%arg0: i32) -> (i32, i32, i32) {
    %c0_i32 = arith.constant 0 : i32
    %c0_i32_0 = arith.constant 0 : i32
    %c0_i32_1 = arith.constant 0 : i32
    return %c0_i32, %arg0, %c0_i32_0 : i32, i32, i32
  }
}

</mosaic_0001>

<llo_original>
// kernel: tpu_custom_call.1
$region0: #{tpu_custom_call.1}
  #allocation0 [shape = 'u32[]', space=smem, size = 0x4, offset = 0x4, fixed_abs, tag = 'smem constant byte address 0x4 - core index']
  #allocation1 [shape = 'u32[144,128]{1,0:T(1,128)}', space=vmem, size = 0x12000, scoped, tag = 'internal scratch']
  #allocation9 [shape = 's32[]', space=sflag, size = 0x4, offset = 0, fixed_abs, tag = 'sflag constant byte address 0x0 - dummy sync flag']
  #allocation11 [shape = 's32[]', space=sflag, size = 0x4, offset = 0, fixed_abs, tag = 'sflag constant byte address 0x0 - dummy sync flag']
  %s0 = inlined_call_operand.hbm [shape: f32[4,128,128], index: 0, kind: input, shape index: {}]
  %s1 = inlined_call_operand.hbm [shape: bf16[128,128], index: 1, kind: input, shape index: {}]
  %s2 = inlined_call_operand.vmem [shape: f32[1,128], index: 2, kind: input, shape index: {}]
  %s3 = inlined_call_operand.vmem [shape: f32[1,128], index: 3, kind: input, shape index: {}]
  %s4 = inlined_call_operand.hbm [shape: bf16[128,128], index: 4, kind: input, shape index: {}]
  %s5 = inlined_call_operand.vmem [shape: f32[1,128], index: 5, kind: input, shape index: {}]
  %s6 = inlined_call_operand.vmem [shape: f32[1,128], index: 6, kind: input, shape index: {}]
  %s7 = inlined_call_operand.hbm [shape: f32[4,128,128], index: 7, kind: output, shape index: {}]
  %s8 = sld [smem:[#allocation0]]
  $region73: #{tpu_custom_call.1} parent=0
    _
  %s10 = ssub.s32 1, %s8
  %s11 = scalar_select 0, %s10, %s8
  $region1: #{tpu_custom_call.1} parent=0
    #allocation2 [shape = 'u8[262144]{0}', space=vmem, size = 0x40000, scoped, tag = 'input window, operand 0']
    #allocation3 [shape = 's32[2]{0}', space=sflag, size = 0x8, scoped, tag = 'scoped memory for tpu_custom_call.1']
    #allocation4 [shape = 's32[2]{0}', space=sflag, size = 0x8, scoped, tag = 'scoped memory for tpu_custom_call.1']
    #allocation5 [shape = 'u8[32768]{0}', space=vmem, size = 0x8000, scoped, tag = 'input window, operand 1, single buffered']
    #allocation6 [shape = 's32[1]{0}', space=sflag, size = 0x4, scoped, tag = 'scoped memory for tpu_custom_call.1']
    #allocation7 [shape = 'u8[32768]{0}', space=vmem, size = 0x8000, scoped, tag = 'input window, operand 4, single buffered']
    #allocation8 [shape = 'u8[262144]{0}', space=vmem, size = 0x40000, scoped, tag = 'output window, operand 0']
    %12 = vsyncpa [#allocation3], 0
    %s13 = scalar_lea.sflag [#allocation3], 1
    %14 = vsyncpa %s13, 0
    %15 = vsyncpa [#allocation6], 0
    %16 = vsyncpa [#allocation4], 0
    %s17 = scalar_lea.sflag [#allocation4], 1
    %18 = vsyncpa %s17, 0
    loop: start=0, step=1, limit=4
    $region2: #{tpu_custom_call.1} parent=1 // loop_pre_header
      _
    $region3: #{tpu_custom_call.1} parent=1 // loop_header
      %s20 = sphi 0, %s24
      %p21 = scmp.ge.s32.totalorder %s20, 4
      %s30 = sphi 0, %s32
      %s33 = sphi 0, %s30
      %s34 = sphi 0, %s33
      %s50 = sphi 0, %s34
      %s54 = sphi 0, %s54
      %s56 = sphi 0, %s54
      %s57 = sphi 0, %s56
      %s71 = sphi 0, %s57
      %s75 = sphi 0, %s75
      %s77 = sphi 0, %s75
      %s78 = sphi 0, %s77
      %s92 = sphi 0, %s78
      %s96 = sphi 0, %s96
      %s98 = sphi 0, %s96
      %s99 = sphi 0, %s98
      %s113 = sphi 0, %s99
      %s117 = sphi 0, %s117
      %s119 = sphi 0, %s117
      %s120 = sphi 0, %s119
      %s134 = sphi 0, %s120
      %s138 = sphi 0, %s138
      %s140 = sphi 0, %s138
      %s141 = sphi 0, %s140
      %s155 = sphi 0, %s141
      %s159 = sphi 0, %s159
      %s161 = sphi 0, %s159
      %s162 = sphi 0, %s161
      %s176 = sphi 0, %s162
      %s182 = sphi 0, %s184
      %s185 = sphi 0, %s182
      %s186 = sphi 0, %s185
      %s202 = sphi 0, %s186
    $region4: #{tpu_custom_call.1} parent=1 // loop_header_branch
      %23 = sbr.rel (%p21) target = $region8
    $region5: #{tpu_custom_call.1} parent=1 // loop_body
      %s25 = ssub.s32 %s20, 1
      %s26 = ssub.s32 %s20, 2
      %s27 = sadd.s32 %s20, 1
      %s28 = ssub.s32 %s20, %s27
      %p29 = scmp.eq.s32.totalorder %s28, 0
      %s31 = sadd.s32 %s30, 1
      %s32 = scalar_select %p29, %s30, %s31
      %p35 = pneg %p29
      %p36 = scmp.eq.s32.totalorder %s20, 1
      %p37 = por %p35, %p36
      %p38 = scmp.ne.s32.totalorder %s30, %s33
      %p39 = scmp.eq.s32.totalorder %s20, 0
      %p40 = por %p38, %p39
      %p41 = scmp.ne.s32.totalorder %s30, %s33
      %p42 = scmp.eq.s32.totalorder %s25, 1
      %p43 = por %p41, %p42
      %p44 = scmp.ne.s32.totalorder %s33, %s34
      %p45 = scmp.eq.s32.totalorder %s25, 0
      %p46 = por %p44, %p45
      %p47 = scmp.ne.s32.totalorder %s33, %s34
      %p48 = scmp.eq.s32.totalorder %s26, 1
      %p49 = por %p47, %p48
      %p51 = scmp.ne.s32.totalorder %s34, %s50
      %p52 = scmp.eq.s32.totalorder %s26, 0
      %p53 = por %p51, %p52
      %s55 = sadd.s32 %s54, 1
      %p58 = scmp.eq.s32.totalorder %s20, 1
      %p59 = scmp.ne.s32.totalorder %s54, %s56
      %p60 = scmp.eq.s32.totalorder %s20, 0
      %p61 = por %p59, %p60
      %p62 = scmp.ne.s32.totalorder %s54, %s56
      %p63 = scmp.eq.s32.totalorder %s25, 1
      %p64 = por %p62, %p63
      %p65 = scmp.ne.s32.totalorder %s56, %s57
      %p66 = scmp.eq.s32.totalorder %s25, 0
      %p67 = por %p65, %p66
      %p68 = scmp.ne.s32.totalorder %s56, %s57
      %p69 = scmp.eq.s32.totalorder %s26, 1
      %p70 = por %p68, %p69
      %p72 = scmp.ne.s32.totalorder %s57, %s71
      %p73 = scmp.eq.s32.totalorder %s26, 0
      %p74 = por %p72, %p73
      %s76 = sadd.s32 %s75, 1
      %p79 = scmp.eq.s32.totalorder %s20, 1
      %p80 = scmp.ne.s32.totalorder %s75, %s77
      %p81 = scmp.eq.s32.totalorder %s20, 0
      %p82 = por %p80, %p81
      %p83 = scmp.ne.s32.totalorder %s75, %s77
      %p84 = scmp.eq.s32.totalorder %s25, 1
      %p85 = por %p83, %p84
      %p86 = scmp.ne.s32.totalorder %s77, %s78
      %p87 = scmp.eq.s32.totalorder %s25, 0
      %p88 = por %p86, %p87
      %p89 = scmp.ne.s32.totalorder %s77, %s78
      %p90 = scmp.eq.s32.totalorder %s26, 1
      %p91 = por %p89, %p90
      %p93 = scmp.ne.s32.totalorder %s78, %s92
      %p94 = scmp.eq.s32.totalorder %s26, 0
      %p95 = por %p93, %p94
      %s97 = sadd.s32 %s96, 1
      %p100 = scmp.eq.s32.totalorder %s20, 1
      %p101 = scmp.ne.s32.totalorder %s96, %s98
      %p102 = scmp.eq.s32.totalorder %s20, 0
      %p103 = por %p101, %p102
      %p104 = scmp.ne.s32.totalorder %s96, %s98
      %p105 = scmp.eq.s32.totalorder %s25, 1
      %p106 = por %p104, %p105
      %p107 = scmp.ne.s32.totalorder %s98, %s99
      %p108 = scmp.eq.s32.totalorder %s25, 0
      %p109 = por %p107, %p108
      %p110 = scmp.ne.s32.totalorder %s98, %s99
      %p111 = scmp.eq.s32.totalorder %s26, 1
      %p112 = por %p110, %p111
      %p114 = scmp.ne.s32.totalorder %s99, %s113
      %p115 = scmp.eq.s32.totalorder %s26, 0
      %p116 = por %p114, %p115
      %s118 = sadd.s32 %s117, 1
      %p121 = scmp.eq.s32.totalorder %s20, 1
      %p122 = scmp.ne.s32.totalorder %s117, %s119
      %p123 = scmp.eq.s32.totalorder %s20, 0
      %p124 = por %p122, %p123
      %p125 = scmp.ne.s32.totalorder %s117, %s119
      %p126 = scmp.eq.s32.totalorder %s25, 1
      %p127 = por %p125, %p126
      %p128 = scmp.ne.s32.totalorder %s119, %s120
      %p129 = scmp.eq.s32.totalorder %s25, 0
      %p130 = por %p128, %p129
      %p131 = scmp.ne.s32.totalorder %s119, %s120
      %p132 = scmp.eq.s32.totalorder %s26, 1
      %p133 = por %p131, %p132
      %p135 = scmp.ne.s32.totalorder %s120, %s134
      %p136 = scmp.eq.s32.totalorder %s26, 0
      %p137 = por %p135, %p136
      %s139 = sadd.s32 %s138, 1
      %p142 = scmp.eq.s32.totalorder %s20, 1
      %p143 = scmp.ne.s32.totalorder %s138, %s140
      %p144 = scmp.eq.s32.totalorder %s20, 0
      %p145 = por %p143, %p144
      %p146 = scmp.ne.s32.totalorder %s138, %s140
      %p147 = scmp.eq.s32.totalorder %s25, 1
      %p148 = por %p146, %p147
      %p149 = scmp.ne.s32.totalorder %s140, %s141
      %p150 = scmp.eq.s32.totalorder %s25, 0
      %p151 = por %p149, %p150
      %p152 = scmp.ne.s32.totalorder %s140, %s141
      %p153 = scmp.eq.s32.totalorder %s26, 1
      %p154 = por %p152, %p153
      %p156 = scmp.ne.s32.totalorder %s141, %s155
      %p157 = scmp.eq.s32.totalorder %s26, 0
      %p158 = por %p156, %p157
      %s160 = sadd.s32 %s159, 1
      %p163 = scmp.eq.s32.totalorder %s20, 1
      %p164 = scmp.ne.s32.totalorder %s159, %s161
      %p165 = scmp.eq.s32.totalorder %s20, 0
      %p166 = por %p164, %p165
      %p167 = scmp.ne.s32.totalorder %s159, %s161
      %p168 = scmp.eq.s32.totalorder %s25, 1
      %p169 = por %p167, %p168
      %p170 = scmp.ne.s32.totalorder %s161, %s162
      %p171 = scmp.eq.s32.totalorder %s25, 0
      %p172 = por %p170, %p171
      %p173 = scmp.ne.s32.totalorder %s161, %s162
      %p174 = scmp.eq.s32.totalorder %s26, 1
      %p175 = por %p173, %p174
      %p177 = scmp.ne.s32.totalorder %s162, %s176
      %p178 = scmp.eq.s32.totalorder %s26, 0
      %p179 = por %p177, %p178
      %s180 = ssub.s32 %s20, %s27
      %p181 = scmp.eq.s32.totalorder %s180, 0
      %s183 = sadd.s32 %s182, 1
      %s184 = scalar_select %p181, %s182, %s183
      %p187 = pneg %p181
      %p188 = scmp.eq.s32.totalorder %s20, 1
      %p189 = por %p187, %p188
      %p190 = scmp.ne.s32.totalorder %s182, %s185
      %p191 = scmp.eq.s32.totalorder %s20, 0
      %p192 = por %p190, %p191
      %p193 = scmp.ne.s32.totalorder %s182, %s185
      %p194 = scmp.eq.s32.totalorder %s25, 1
      %p195 = por %p193, %p194
      %p196 = scmp.ne.s32.totalorder %s185, %s186
      %p197 = scmp.eq.s32.totalorder %s25, 0
      %p198 = por %p196, %p197
      %p199 = scmp.ne.s32.totalorder %s185, %s186
      %p200 = scmp.eq.s32.totalorder %s26, 1
      %p201 = por %p199, %p200
      %p203 = scmp.ne.s32.totalorder %s186, %s202
      %p204 = scmp.eq.s32.totalorder %s26, 0
      %p205 = por %p203, %p204
      %p206 = scmp.le.s32.totalorder 1, %s20
      %p207 = scmp.lt.s32.totalorder %s20, 3
      %p208 = pnand %p206, %p207
      %p209 = pneg %p208
      // Predicated region
      $region9: #{tpu_custom_call.1} parent=5 // pred_check
        _
      $region10: #{tpu_custom_call.1} parent=5 // pred_check_branch
        %211 = sbr.rel (%p208) target = $region12
      $region11: #{tpu_custom_call.1} parent=5 // pred_region
        %s212 = ssub.s32 %s20, 1
        // Predicated region
        $region13: #{tpu_custom_call.1} parent=11 // pred_check
          %p213 = pneg %p67
        $region14: #{tpu_custom_call.1} parent=11 // pred_check_branch
          %215 = sbr.rel (%p213) target = $region16
        $region15: #{tpu_custom_call.1} parent=11 // pred_region
          %s217 = ssub.s32 1024, 1024
          %218 = vsyncadd [#allocation6], %s217
          %s219 = sshll.u32 [#allocation5], 4
          %s220 = int_to_ptr.vmem [resolvable:$true] %s219
          %225 = dma.hbm_to_vmem [thread:$0]  %s1, 1024, %s220, [#allocation6], 64, 64, 4
        $region16: #{tpu_custom_call.1} parent=11 // pred_fallthru
          _
        // Predicated region
        $region17: #{tpu_custom_call.1} parent=11 // pred_check
          %p226 = pneg %p88
        $region18: #{tpu_custom_call.1} parent=11 // pred_check_branch
          %228 = sbr.rel (%p226) target = $region20
        $region19: #{tpu_custom_call.1} parent=11 // pred_region
          _
        $region20: #{tpu_custom_call.1} parent=11 // pred_fallthru
          _
        // Predicated region
        $region21: #{tpu_custom_call.1} parent=11 // pred_check
          %p229 = pneg %p109
        $region22: #{tpu_custom_call.1} parent=11 // pred_check_branch
          %231 = sbr.rel (%p229) target = $region24
        $region23: #{tpu_custom_call.1} parent=11 // pred_region
          _
        $region24: #{tpu_custom_call.1} parent=11 // pred_fallthru
          _
        // Predicated region
        $region25: #{tpu_custom_call.1} parent=11 // pred_check
          %p232 = pneg %p130
        $region26: #{tpu_custom_call.1} parent=11 // pred_check_branch
          %234 = sbr.rel (%p232) target = $region28
        $region27: #{tpu_custom_call.1} parent=11 // pred_region
          %s236 = ssub.s32 1024, 1024
          %237 = vsyncadd [#allocation6], %s236
          %s238 = sshll.u32 [#allocation7], 4
          %s239 = int_to_ptr.vmem [resolvable:$true] %s238
          %244 = dma.hbm_to_vmem [thread:$0]  %s4, 1024, %s239, [#allocation6], 64, 64, 4
        $region28: #{tpu_custom_call.1} parent=11 // pred_fallthru
          _
        // Predicated region
        $region29: #{tpu_custom_call.1} parent=11 // pred_check
          %p245 = pneg %p151
        $region30: #{tpu_custom_call.1} parent=11 // pred_check_branch
          %247 = sbr.rel (%p245) target = $region32
        $region31: #{tpu_custom_call.1} parent=11 // pred_region
          _
        $region32: #{tpu_custom_call.1} parent=11 // pred_fallthru
          _
        // Predicated region
        $region33: #{tpu_custom_call.1} parent=11 // pred_check
          %p248 = pneg %p172
        $region34: #{tpu_custom_call.1} parent=11 // pred_check_branch
          %250 = sbr.rel (%p248) target = $region36
        $region35: #{tpu_custom_call.1} parent=11 // pred_region
          _
        $region36: #{tpu_custom_call.1} parent=11 // pred_fallthru
          _
      $region12: #{tpu_custom_call.1} parent=5 // pred_fallthru
        _
      %p251 = scmp.lt.s32.totalorder %s20, 2
      // Predicated region
      $region37: #{tpu_custom_call.1} parent=5 // pred_check
        %p252 = pneg %p251
      $region38: #{tpu_custom_call.1} parent=5 // pred_check_branch
        %254 = sbr.rel (%p252) target = $region40
      $region39: #{tpu_custom_call.1} parent=5 // pred_region
        // Predicated region
        $region41: #{tpu_custom_call.1} parent=39 // pred_check
          %p255 = pneg %p40
        $region42: #{tpu_custom_call.1} parent=39 // pred_check_branch
          %257 = sbr.rel (%p255) target = $region44
        $region43: #{tpu_custom_call.1} parent=39 // pred_region
          #allocation10 [shape = 'u32[6]{0}', space=smem, size = 0x18, scoped, tag = 'DMA stride descriptor']
          %s258 = sand.u32 %s30, 1
          %s259 = scalar_lea.sflag [#allocation3], %s258
          %s260 = sand.u32 %s30, 1
          %s261 = smul.addr %s260, 256
          %s262 = scalar_lea.vmem [#allocation2], %s261
          %s263 = smul.u32 8, %s20
          %s265 = ssub.s32 4096, 4096
          %266 = vsyncadd %s259, %s265
          %s267 = smul.addr %s263, 128
          %s268 = scalar_lea.hbm %s0, %s267
          %s270 = sshll.u32 1, 14
          %s271 = sxor.u32 4294967295, %s270
          %s273 = sld [smem:[#allocation0]]
          %s274 = sadd.s32 2, %s273
          %s276 = sshll.u32 7, 26
          %s277 = sxor.u32 4294967295, %s276
          %s278 = sand.u32 0, %s277
          %s279 = sshll.u32 %s274, 26
          %s280 = sor.u32 %s278, %s279
          %s281 = sshll.u32 %s262, 4
          %s282 = int_to_ptr.vmem [resolvable:$true] %s281
          %288 = sst [smem:[#allocation10]] 2048
          %s289 = scalar_lea.smem [#allocation10], 1
          %290 = sst [smem:[%s289]] 1024
          %s291 = scalar_lea.smem [#allocation10], 2
          %292 = sst [smem:[%s291]] 8
          %s293 = scalar_lea.smem [#allocation10], 3
          %294 = sst [smem:[%s293]] 128
          %s295 = scalar_lea.smem [#allocation10], 4
          %296 = sst [smem:[%s295]] 128
          %s297 = scalar_lea.smem [#allocation10], 5
          %298 = sst [smem:[%s297]] 8
          %300 = dma.general %s268, 4096, %s282, %s259, [#allocation9], [#allocation10], %s280, 0
        $region44: #{tpu_custom_call.1} parent=39 // pred_fallthru
          _
      $region40: #{tpu_custom_call.1} parent=5 // pred_fallthru
        _
      %p301 = scmp.le.s32.totalorder 1, %s20
      %p302 = scmp.lt.s32.totalorder %s20, 3
      %p303 = pnand %p301, %p302
      %p304 = pneg %p303
      // Predicated region
      $region45: #{tpu_custom_call.1} parent=5 // pred_check
        _
      $region46: #{tpu_custom_call.1} parent=5 // pred_check_branch
        %306 = sbr.rel (%p303) target = $region48
      $region47: #{tpu_custom_call.1} parent=5 // pred_region
        %s307 = ssub.s32 %s20, 1
        %s308 = sand.u32 %s33, 1
        %s309 = scalar_lea.sflag [#allocation3], %s308
        %s310 = sand.u32 %s33, 1
        %s311 = smul.addr %s310, 256
        %s312 = scalar_lea.vmem [#allocation2], %s311
        // Predicated region
        $region49: #{tpu_custom_call.1} parent=47 // pred_check
          %p313 = pneg %p46
        $region50: #{tpu_custom_call.1} parent=47 // pred_check_branch
          %315 = sbr.rel (%p313) target = $region52
        $region51: #{tpu_custom_call.1} parent=47 // pred_region
          %316 = dma.done %s309, 4096
        $region52: #{tpu_custom_call.1} parent=47 // pred_fallthru
          _
        // Predicated region
        $region53: #{tpu_custom_call.1} parent=47 // pred_check
          %p317 = pneg %p67
        $region54: #{tpu_custom_call.1} parent=47 // pred_check_branch
          %319 = sbr.rel (%p317) target = $region56
        $region55: #{tpu_custom_call.1} parent=47 // pred_region
          %320 = dma.done [#allocation6], 1024
        $region56: #{tpu_custom_call.1} parent=47 // pred_fallthru
          _
        // Predicated region
        $region57: #{tpu_custom_call.1} parent=47 // pred_check
          %p321 = pneg %p130
        $region58: #{tpu_custom_call.1} parent=47 // pred_check_branch
          %323 = sbr.rel (%p321) target = $region60
        $region59: #{tpu_custom_call.1} parent=47 // pred_region
          %324 = dma.done [#allocation6], 1024
        $region60: #{tpu_custom_call.1} parent=47 // pred_fallthru
          _
        %s325 = sand.u32 %s33, 1
        %s326 = scalar_lea.sflag [#allocation3], %s325
        %s327 = sand.u32 %s33, 1
        %s328 = smul.addr %s327, 256
        %s329 = scalar_lea.vmem [#allocation2], %s328
        %p330 = pneg %p46
        %p331 = pneg %p43
        %p332 = pneg %p67
        %p333 = pneg %p64
        %p334 = pneg %p88
        %p335 = pneg %p85
        %p336 = pneg %p109
        %p337 = pneg %p106
        %p338 = pneg %p130
        %p339 = pneg %p127
        %p340 = pneg %p151
        %p341 = pneg %p148
        %p342 = pneg %p172
        %p343 = pneg %p169
        %p344 = pneg %p198
        %p345 = pneg %p195
        %s346 = sand.u32 %s185, 1
        %s347 = scalar_lea.sflag [#allocation4], %s346
        %s348 = sand.u32 %s185, 1
        %s349 = smul.addr %s348, 256
        %s350 = scalar_lea.vmem [#allocation8], %s349
        %s351 = smul.u32 8, %s25
        %s352 = smul.u32 8, %s25
        %v354 = vld [vmem:[#allocation5] sm:$0xf]
        %v355 = vld [vmem:[#allocation5 + $0x4] sm:$0xf]
        %v356 = vld [vmem:[#allocation5 + $0x8] sm:$0xf]
        %v357 = vld [vmem:[#allocation5 + $0xc] sm:$0xf]
        %v358 = vld [vmem:[#allocation5 + $0x10] sm:$0xf]
        %v359 = vld [vmem:[#allocation5 + $0x14] sm:$0xf]
        %v360 = vld [vmem:[#allocation5 + $0x18] sm:$0xf]
        %v361 = vld [vmem:[#allocation5 + $0x1c] sm:$0xf]
        %v362 = vld [vmem:[#allocation5 + $0x20] sm:$0xf]
        %v363 = vld [vmem:[#allocation5 + $0x24] sm:$0xf]
        %v364 = vld [vmem:[#allocation5 + $0x28] sm:$0xf]
        %v365 = vld [vmem:[#allocation5 + $0x2c] sm:$0xf]
        %v366 = vld [vmem:[#allocation5 + $0x30] sm:$0xf]
        %v367 = vld [vmem:[#allocation5 + $0x34] sm:$0xf]
        %v368 = vld [vmem:[#allocation5 + $0x38] sm:$0xf]
        %v369 = vld [vmem:[#allocation5 + $0x3c] sm:$0xf]
        %v370 = vld [vmem:[#allocation7] sm:$0xf]
        %v371 = vld [vmem:[#allocation7 + $0x4] sm:$0xf]
        %v372 = vld [vmem:[#allocation7 + $0x8] sm:$0xf]
        %v373 = vld [vmem:[#allocation7 + $0xc] sm:$0xf]
        %v374 = vld [vmem:[#allocation7 + $0x10] sm:$0xf]
        %v375 = vld [vmem:[#allocation7 + $0x14] sm:$0xf]
        %v376 = vld [vmem:[#allocation7 + $0x18] sm:$0xf]
        %v377 = vld [vmem:[#allocation7 + $0x1c] sm:$0xf]
        %v378 = vld [vmem:[#allocation7 + $0x20] sm:$0xf]
        %v379 = vld [vmem:[#allocation7 + $0x24] sm:$0xf]
        %v380 = vld [vmem:[#allocation7 + $0x28] sm:$0xf]
        %v381 = vld [vmem:[#allocation7 + $0x2c] sm:$0xf]
        %v382 = vld [vmem:[#allocation7 + $0x30] sm:$0xf]
        %v383 = vld [vmem:[#allocation7 + $0x34] sm:$0xf]
        %v384 = vld [vmem:[#allocation7 + $0x38] sm:$0xf]
        %v385 = vld [vmem:[#allocation7 + $0x3c] sm:$0xf]
        %v386 = vld [vmem:[%s2] sm:$0x1]
        %v387 = vld [vmem:[%s3] sm:$0x1]
        %v388 = vld [vmem:[%s5] sm:$0x1]
        %v389 = vld [vmem:[%s6] sm:$0x1]
        %v390 = vld [vmem:[%s312] sm:$0xff]
        %v391 = vld [vmem:[%s312 + $0x8] sm:$0xff]
        %v392 = vld [vmem:[%s312 + $0x10] sm:$0xff]
        %v393 = vld [vmem:[%s312 + $0x18] sm:$0xff]
        %v394 = vld [vmem:[%s312 + $0x20] sm:$0xff]
        %v395 = vld [vmem:[%s312 + $0x28] sm:$0xff]
        %v396 = vld [vmem:[%s312 + $0x30] sm:$0xff]
        %v397 = vld [vmem:[%s312 + $0x38] sm:$0xff]
        %v398 = vmul.f32 %v390, 0.5
        %v399 = vmul.f32 %v391, 0.5
        %v400 = vmul.f32 %v392, 0.5
        %v401 = vmul.f32 %v393, 0.5
        %v402 = vmul.f32 %v394, 0.5
        %v403 = vmul.f32 %v395, 0.5
        %v404 = vmul.f32 %v396, 0.5
        %v405 = vmul.f32 %v397, 0.5
        %v406 = vadd.f32 %v398, 0.0
        %v407 = vadd.f32 %v399, 0.0
        %v408 = vadd.f32 %v400, 0.0
        %v409 = vadd.f32 %v401, 0.0
        %v410 = vadd.f32 %v402, 0.0
        %v411 = vadd.f32 %v403, 0.0
        %v412 = vadd.f32 %v404, 0.0
        %v413 = vadd.f32 %v405, 0.0
        %vm414 = vcmp.ge.f32.partialorder %v406, 1.0
        %vm415 = vcmp.ge.f32.partialorder %v407, 1.0
        %vm416 = vcmp.ge.f32.partialorder %v408, 1.0
        %vm417 = vcmp.ge.f32.partialorder %v409, 1.0
        %vm418 = vcmp.ge.f32.partialorder %v410, 1.0
        %vm419 = vcmp.ge.f32.partialorder %v411, 1.0
        %vm420 = vcmp.ge.f32.partialorder %v412, 1.0
        %vm421 = vcmp.ge.f32.partialorder %v413, 1.0
        %v422 = vsel %vm414, 0.0, %v406
        %v423 = vsel %vm415, 0.0, %v407
        %v424 = vsel %vm416, 0.0, %v408
        %v425 = vsel %vm417, 0.0, %v409
        %v426 = vsel %vm418, 0.0, %v410
        %v427 = vsel %vm419, 0.0, %v411
        %v428 = vsel %vm420, 0.0, %v412
        %v429 = vsel %vm421, 0.0, %v413
        %v430 = vsel %vm414, 1, 0
        %v431 = vsel %vm415, 1, 0
        %v432 = vsel %vm416, 1, 0
        %v433 = vsel %vm417, 1, 0
        %v434 = vsel %vm418, 1, 0
        %v435 = vsel %vm419, 1, 0
        %v436 = vsel %vm420, 1, 0
        %v437 = vsel %vm421, 1, 0
        %v438 = vcvt.s32.f32 %v430
        %v439 = vcvt.s32.f32 %v431
        %v440 = vcvt.s32.f32 %v432
        %v441 = vcvt.s32.f32 %v433
        %v442 = vcvt.s32.f32 %v434
        %v443 = vcvt.s32.f32 %v435
        %v444 = vcvt.s32.f32 %v436
        %v445 = vcvt.s32.f32 %v437
        %v446 = vpack.c.bf16 %v439, %v438
        %v447 = vpack.c.bf16 %v441, %v440
        %v448 = vpack.c.bf16 %v443, %v442
        %v449 = vpack.c.bf16 %v445, %v444
        %v466 = vunpack.c.l.b16 %v354
        %v467 = vunpack.c.l.b16 %v355
        %v468 = vunpack.c.l.b16 %v356
        %v469 = vunpack.c.l.b16 %v357
        %v470 = vunpack.c.l.b16 %v358
        %v471 = vunpack.c.l.b16 %v359
        %v472 = vunpack.c.l.b16 %v360
        %v473 = vunpack.c.l.b16 %v361
        %v474 = vunpack.c.l.b16 %v362
        %v475 = vunpack.c.l.b16 %v363
        %v476 = vunpack.c.l.b16 %v364
        %v477 = vunpack.c.l.b16 %v365
        %v478 = vunpack.c.l.b16 %v366
        %v479 = vunpack.c.l.b16 %v367
        %v480 = vunpack.c.l.b16 %v368
        %v481 = vunpack.c.l.b16 %v369
        %v482 = vpack.c.b16 %v467, %v466
        %v483 = vpack.c.b16 %v469, %v468
        %v484 = vpack.c.b16 %v471, %v470
        %v485 = vpack.c.b16 %v473, %v472
        %v486 = vpack.c.b16 %v475, %v474
        %v487 = vpack.c.b16 %v477, %v476
        %v488 = vpack.c.b16 %v479, %v478
        %v489 = vpack.c.b16 %v481, %v480
        %498 = vmatprep.subr.bf16.mxu0 0
        %499 = vmatpush1.bf16.msra.mxu0 %v482
        %500 = vmatprep.subr.bf16.mxu0 0
        %501 = vmatpush1.bf16.msra.mxu0 %v483
        %502 = vmatprep.subr.bf16.mxu0 0
        %503 = vmatpush1.bf16.msra.mxu0 %v484
        %504 = vmatprep.subr.bf16.mxu0 0
        %505 = vmatpush1.bf16.msra.mxu0 %v485
        %506 = vmatprep.subr.bf16.mxu0 0
        %507 = vmatpush1.bf16.msra.mxu0 %v486
        %508 = vmatprep.subr.bf16.mxu0 0
        %509 = vmatpush1.bf16.msra.mxu0 %v487
        %510 = vmatprep.subr.bf16.mxu0 0
        %511 = vmatpush1.bf16.msra.mxu0 %v488
        %512 = vmatprep.subr.bf16.mxu0 0
        %513 = vmatpush1.bf16.msra.mxu0 %v489
        %514 = vmatprep.subr.bf16.mxu0 0
        %515 = vmatpush1.bf16.msra.mxu0 0
        %516 = vmatprep.subr.bf16.mxu0 0
        %517 = vmatpush1.bf16.msra.mxu0 0
        %518 = vmatprep.subr.bf16.mxu0 0
        %519 = vmatpush1.bf16.msra.mxu0 0
        %520 = vmatprep.subr.bf16.mxu0 0
        %521 = vmatpush1.bf16.msra.mxu0 0
        %522 = vmatprep.subr.bf16.mxu0 0
        %523 = vmatpush1.bf16.msra.mxu0 0
        %524 = vmatprep.subr.bf16.mxu0 0
        %525 = vmatpush1.bf16.msra.mxu0 0
        %526 = vmatprep.subr.bf16.mxu0 0
        %527 = vmatpush1.bf16.msra.mxu0 0
        %528 = vmatprep.subr.bf16.mxu0 0
        %529 = vmatpush1.bf16.msra.mxu0 0
        %530 = vmatprep.mubr.bf16.mxu0 0
        %531 = vmatmul.mubr.bf16.gmra.mrb[0].mxu0 %v446
        %v532 = vpop.f32.mrb[0].mxu0
        %v533 = vadd.f32 0.0, %v532
        %v534 = vpop.f32.mrb[0].mxu0
        %v535 = vpop.f32.mrb[0].mxu0
        %v536 = vadd.f32 0.0, %v535
        %v537 = vpop.f32.mrb[0].mxu0
        %538 = vmatprep.mubr.bf16.mxu0 0
        %539 = vmatmul.mubr.bf16.gmra.mrb[0].mxu0 %v447
        %v540 = vpop.f32.mrb[0].mxu0
        %v541 = vadd.f32 0.0, %v540
        %v542 = vpop.f32.mrb[0].mxu0
        %v543 = vpop.f32.mrb[0].mxu0
        %v544 = vadd.f32 0.0, %v543
        %v545 = vpop.f32.mrb[0].mxu0
        %546 = vmatprep.mubr.bf16.mxu0 0
        %547 = vmatmul.mubr.bf16.gmra.mrb[0].mxu0 %v448
        %v548 = vpop.f32.mrb[0].mxu0
        %v549 = vadd.f32 0.0, %v548
        %v550 = vpop.f32.mrb[0].mxu0
        %v551 = vpop.f32.mrb[0].mxu0
        %v552 = vadd.f32 0.0, %v551
        %v553 = vpop.f32.mrb[0].mxu0
        %554 = vmatprep.mubr.bf16.mxu0 0
        %555 = vmatmul.mubr.bf16.gmra.mrb[0].mxu0 %v449
        %v556 = vpop.f32.mrb[0].mxu0
        %v557 = vadd.f32 0.0, %v556
        %v558 = vpop.f32.mrb[0].mxu0
        %v559 = vpop.f32.mrb[0].mxu0
        %v560 = vadd.f32 0.0, %v559
        %v561 = vpop.f32.mrb[0].mxu0
        %562 = vdwg.mxu0
        %v564 = vlaneseq
        %v565 = vshrl.u32 %v564, 7
        %v566 = vsub.s32 0, %v565
        %v567 = vrot.slane %v386, %v566
        %v569 = vmul.f32 %v533, %v567
        %v570 = vmul.f32 %v536, %v567
        %v571 = vmul.f32 %v541, %v567
        %v572 = vmul.f32 %v544, %v567
        %v573 = vmul.f32 %v549, %v567
        %v574 = vmul.f32 %v552, %v567
        %v575 = vmul.f32 %v557, %v567
        %v576 = vmul.f32 %v560, %v567
        %v578 = vlaneseq
        %v579 = vshrl.u32 %v578, 7
        %v580 = vsub.s32 0, %v579
        %v581 = vrot.slane %v387, %v580
        %v583 = vadd.f32 %v569, %v581
        %v584 = vadd.f32 %v570, %v581
        %v585 = vadd.f32 %v571, %v581
        %v586 = vadd.f32 %v572, %v581
        %v587 = vadd.f32 %v573, %v581
        %v588 = vadd.f32 %v574, %v581
        %v589 = vadd.f32 %v575, %v581
        %v590 = vadd.f32 %v576, %v581
        %v591 = vadd.f32 %v390, %v583
        %v592 = vadd.f32 %v391, %v584
        %v593 = vadd.f32 %v392, %v585
        %v594 = vadd.f32 %v393, %v586
        %v595 = vadd.f32 %v394, %v587
        %v596 = vadd.f32 %v395, %v588
        %v597 = vadd.f32 %v396, %v589
        %v598 = vadd.f32 %v397, %v590
        %v599 = vmul.f32 %v591, 0.5
        %v600 = vmul.f32 %v592, 0.5
        %v601 = vmul.f32 %v593, 0.5
        %v602 = vmul.f32 %v594, 0.5
        %v603 = vmul.f32 %v595, 0.5
        %v604 = vmul.f32 %v596, 0.5
        %v605 = vmul.f32 %v597, 0.5
        %v606 = vmul.f32 %v598, 0.5
        %v607 = vadd.f32 %v599, 0.0
        %v608 = vadd.f32 %v600, 0.0
        %v609 = vadd.f32 %v601, 0.0
        %v610 = vadd.f32 %v602, 0.0
        %v611 = vadd.f32 %v603, 0.0
        %v612 = vadd.f32 %v604, 0.0
        %v613 = vadd.f32 %v605, 0.0
        %v614 = vadd.f32 %v606, 0.0
        %vm615 = vcmp.ge.f32.partialorder %v607, 1.0
        %vm616 = vcmp.ge.f32.partialorder %v608, 1.0
        %vm617 = vcmp.ge.f32.partialorder %v609, 1.0
        %vm618 = vcmp.ge.f32.partialorder %v610, 1.0
        %vm619 = vcmp.ge.f32.partialorder %v611, 1.0
        %vm620 = vcmp.ge.f32.partialorder %v612, 1.0
        %vm621 = vcmp.ge.f32.partialorder %v613, 1.0
        %vm622 = vcmp.ge.f32.partialorder %v614, 1.0
        %v623 = vsel %vm615, 0.0, %v607
        %v624 = vsel %vm616, 0.0, %v608
        %v625 = vsel %vm617, 0.0, %v609
        %v626 = vsel %vm618, 0.0, %v610
        %v627 = vsel %vm619, 0.0, %v611
        %v628 = vsel %vm620, 0.0, %v612
        %v629 = vsel %vm621, 0.0, %v613
        %v630 = vsel %vm622, 0.0, %v614
        %v631 = vsel %vm615, 1, 0
        %v632 = vsel %vm616, 1, 0
        %v633 = vsel %vm617, 1, 0
        %v634 = vsel %vm618, 1, 0
        %v635 = vsel %vm619, 1, 0
        %v636 = vsel %vm620, 1, 0
        %v637 = vsel %vm621, 1, 0
        %v638 = vsel %vm622, 1, 0
        %v639 = vcvt.s32.f32 %v631
        %v640 = vcvt.s32.f32 %v632
        %v641 = vcvt.s32.f32 %v633
        %v642 = vcvt.s32.f32 %v634
        %v643 = vcvt.s32.f32 %v635
        %v644 = vcvt.s32.f32 %v636
        %v645 = vcvt.s32.f32 %v637
        %v646 = vcvt.s32.f32 %v638
        %v647 = vpack.c.bf16 %v640, %v639
        %v648 = vpack.c.bf16 %v642, %v641
        %v649 = vpack.c.bf16 %v644, %v643
        %v650 = vpack.c.bf16 %v646, %v645
        %v667 = vunpack.c.l.b16 %v370
        %v668 = vunpack.c.l.b16 %v371
        %v669 = vunpack.c.l.b16 %v372
        %v670 = vunpack.c.l.b16 %v373
        %v671 = vunpack.c.l.b16 %v374
        %v672 = vunpack.c.l.b16 %v375
        %v673 = vunpack.c.l.b16 %v376
        %v674 = vunpack.c.l.b16 %v377
        %v675 = vunpack.c.l.b16 %v378
        %v676 = vunpack.c.l.b16 %v379
        %v677 = vunpack.c.l.b16 %v380
        %v678 = vunpack.c.l.b16 %v381
        %v679 = vunpack.c.l.b16 %v382
        %v680 = vunpack.c.l.b16 %v383
        %v681 = vunpack.c.l.b16 %v384
        %v682 = vunpack.c.l.b16 %v385
        %v683 = vpack.c.b16 %v668, %v667
        %v684 = vpack.c.b16 %v670, %v669
        %v685 = vpack.c.b16 %v672, %v671
        %v686 = vpack.c.b16 %v674, %v673
        %v687 = vpack.c.b16 %v676, %v675
        %v688 = vpack.c.b16 %v678, %v677
        %v689 = vpack.c.b16 %v680, %v679
        %v690 = vpack.c.b16 %v682, %v681
        %699 = vmatprep.subr.bf16.mxu0 0
        %700 = vmatpush1.bf16.msra.mxu0 %v683
        %701 = vmatprep.subr.bf16.mxu0 0
        %702 = vmatpush1.bf16.msra.mxu0 %v684
        %703 = vmatprep.subr.bf16.mxu0 0
        %704 = vmatpush1.bf16.msra.mxu0 %v685
        %705 = vmatprep.subr.bf16.mxu0 0
        %706 = vmatpush1.bf16.msra.mxu0 %v686
        %707 = vmatprep.subr.bf16.mxu0 0
        %708 = vmatpush1.bf16.msra.mxu0 %v687
        %709 = vmatprep.subr.bf16.mxu0 0
        %710 = vmatpush1.bf16.msra.mxu0 %v688
        %711 = vmatprep.subr.bf16.mxu0 0
        %712 = vmatpush1.bf16.msra.mxu0 %v689
        %713 = vmatprep.subr.bf16.mxu0 0
        %714 = vmatpush1.bf16.msra.mxu0 %v690
        %715 = vmatprep.subr.bf16.mxu0 0
        %716 = vmatpush1.bf16.msra.mxu0 0
        %717 = vmatprep.subr.bf16.mxu0 0
        %718 = vmatpush1.bf16.msra.mxu0 0
        %719 = vmatprep.subr.bf16.mxu0 0
        %720 = vmatpush1.bf16.msra.mxu0 0
        %721 = vmatprep.subr.bf16.mxu0 0
        %722 = vmatpush1.bf16.msra.mxu0 0
        %723 = vmatprep.subr.bf16.mxu0 0
        %724 = vmatpush1.bf16.msra.mxu0 0
        %725 = vmatprep.subr.bf16.mxu0 0
        %726 = vmatpush1.bf16.msra.mxu0 0
        %727 = vmatprep.subr.bf16.mxu0 0
        %728 = vmatpush1.bf16.msra.mxu0 0
        %729 = vmatprep.subr.bf16.mxu0 0
        %730 = vmatpush1.bf16.msra.mxu0 0
        %731 = vmatprep.mubr.bf16.mxu0 0
        %732 = vmatmul.mubr.bf16.gmra.mrb[0].mxu0 %v647
        %v733 = vpop.f32.mrb[0].mxu0
        %v734 = vadd.f32 0.0, %v733
        %v735 = vpop.f32.mrb[0].mxu0
        %v736 = vpop.f32.mrb[0].mxu0
        %v737 = vadd.f32 0.0, %v736
        %v738 = vpop.f32.mrb[0].mxu0
        %739 = vmatprep.mubr.bf16.mxu0 0
        %740 = vmatmul.mubr.bf16.gmra.mrb[0].mxu0 %v648
        %v741 = vpop.f32.mrb[0].mxu0
        %v742 = vadd.f32 0.0, %v741
        %v743 = vpop.f32.mrb[0].mxu0
        %v744 = vpop.f32.mrb[0].mxu0
        %v745 = vadd.f32 0.0, %v744
        %v746 = vpop.f32.mrb[0].mxu0
        %747 = vmatprep.mubr.bf16.mxu0 0
        %748 = vmatmul.mubr.bf16.gmra.mrb[0].mxu0 %v649
        %v749 = vpop.f32.mrb[0].mxu0
        %v750 = vadd.f32 0.0, %v749
        %v751 = vpop.f32.mrb[0].mxu0
        %v752 = vpop.f32.mrb[0].mxu0
        %v753 = vadd.f32 0.0, %v752
        %v754 = vpop.f32.mrb[0].mxu0
        %755 = vmatprep.mubr.bf16.mxu0 0
        %756 = vmatmul.mubr.bf16.gmra.mrb[0].mxu0 %v650
        %v757 = vpop.f32.mrb[0].mxu0
        %v758 = vadd.f32 0.0, %v757
        %v759 = vpop.f32.mrb[0].mxu0
        %v760 = vpop.f32.mrb[0].mxu0
        %v761 = vadd.f32 0.0, %v760
        %v762 = vpop.f32.mrb[0].mxu0
        %763 = vdwg.mxu0
        %v765 = vlaneseq
        %v766 = vshrl.u32 %v765, 7
        %v767 = vsub.s32 0, %v766
        %v768 = vrot.slane %v388, %v767
        %v770 = vmul.f32 %v734, %v768
        %v771 = vmul.f32 %v737, %v768
        %v772 = vmul.f32 %v742, %v768
        %v773 = vmul.f32 %v745, %v768
        %v774 = vmul.f32 %v750, %v768
        %v775 = vmul.f32 %v753, %v768
        %v776 = vmul.f32 %v758, %v768
        %v777 = vmul.f32 %v761, %v768
        %v779 = vlaneseq
        %v780 = vshrl.u32 %v779, 7
        %v781 = vsub.s32 0, %v780
        %v782 = vrot.slane %v389, %v781
        %v784 = vadd.f32 %v770, %v782
        %v785 = vadd.f32 %v771, %v782
        %v786 = vadd.f32 %v772, %v782
        %v787 = vadd.f32 %v773, %v782
        %v788 = vadd.f32 %v774, %v782
        %v789 = vadd.f32 %v775, %v782
        %v790 = vadd.f32 %v776, %v782
        %v791 = vadd.f32 %v777, %v782
        %v792 = vadd.f32 %v784, %v591
        %v793 = vadd.f32 %v785, %v592
        %v794 = vadd.f32 %v786, %v593
        %v795 = vadd.f32 %v787, %v594
        %v796 = vadd.f32 %v788, %v595
        %v797 = vadd.f32 %v789, %v596
        %v798 = vadd.f32 %v790, %v597
        %v799 = vadd.f32 %v791, %v598
        %800 = vst [vmem:[%s350] sm:$0xff] %v792
        %801 = vst [vmem:[%s350 + $0x8] sm:$0xff] %v793
        %802 = vst [vmem:[%s350 + $0x10] sm:$0xff] %v794
        %803 = vst [vmem:[%s350 + $0x18] sm:$0xff] %v795
        %804 = vst [vmem:[%s350 + $0x20] sm:$0xff] %v796
        %805 = vst [vmem:[%s350 + $0x28] sm:$0xff] %v797
        %806 = vst [vmem:[%s350 + $0x30] sm:$0xff] %v798
        %807 = vst [vmem:[%s350 + $0x38] sm:$0xff] %v799
        %s808 = scalar_lea.vmem %s312, 64 [#allocation2]
        %v809 = vld [vmem:[%s808] sm:$0xff]
        %v810 = vld [vmem:[%s808 + $0x8] sm:$0xff]
        %v811 = vld [vmem:[%s808 + $0x10] sm:$0xff]
        %v812 = vld [vmem:[%s808 + $0x18] sm:$0xff]
        %v813 = vld [vmem:[%s808 + $0x20] sm:$0xff]
        %v814 = vld [vmem:[%s808 + $0x28] sm:$0xff]
        %v815 = vld [vmem:[%s808 + $0x30] sm:$0xff]
        %v816 = vld [vmem:[%s808 + $0x38] sm:$0xff]
        %v817 = vsub.f32 %v809, %v422
        %v818 = vsub.f32 %v810, %v423
        %v819 = vsub.f32 %v811, %v424
        %v820 = vsub.f32 %v812, %v425
        %v821 = vsub.f32 %v813, %v426
        %v822 = vsub.f32 %v814, %v427
        %v823 = vsub.f32 %v815, %v428
        %v824 = vsub.f32 %v816, %v429
        %v825 = vmul.f32 %v817, 0.5
        %v826 = vmul.f32 %v818, 0.5
        %v827 = vmul.f32 %v819, 0.5
        %v828 = vmul.f32 %v820, 0.5
        %v829 = vmul.f32 %v821, 0.5
        %v830 = vmul.f32 %v822, 0.5
        %v831 = vmul.f32 %v823, 0.5
        %v832 = vmul.f32 %v824, 0.5
        %v833 = vadd.f32 %v422, %v825
        %v834 = vadd.f32 %v423, %v826
        %v835 = vadd.f32 %v424, %v827
        %v836 = vadd.f32 %v425, %v828
        %v837 = vadd.f32 %v426, %v829
        %v838 = vadd.f32 %v427, %v830
        %v839 = vadd.f32 %v428, %v831
        %v840 = vadd.f32 %v429, %v832
        %vm841 = vcmp.ge.f32.partialorder %v833, 1.0
        %vm842 = vcmp.ge.f32.partialorder %v834, 1.0
        %vm843 = vcmp.ge.f32.partialorder %v835, 1.0
        %vm844 = vcmp.ge.f32.partialorder %v836, 1.0
        %vm845 = vcmp.ge.f32.partialorder %v837, 1.0
        %vm846 = vcmp.ge.f32.partialorder %v838, 1.0
        %vm847 = vcmp.ge.f32.partialorder %v839, 1.0
        %vm848 = vcmp.ge.f32.partialorder %v840, 1.0
        %v849 = vsel %vm841, 0.0, %v833
        %v850 = vsel %vm842, 0.0, %v834
        %v851 = vsel %vm843, 0.0, %v835
        %v852 = vsel %vm844, 0.0, %v836
        %v853 = vsel %vm845, 0.0, %v837
        %v854 = vsel %vm846, 0.0, %v838
        %v855 = vsel %vm847, 0.0, %v839
        %v856 = vsel %vm848, 0.0, %v840
        %v857 = vsel %vm841, 1, 0
        %v858 = vsel %vm842, 1, 0
        %v859 = vsel %vm843, 1, 0
        %v860 = vsel %vm844, 1, 0
        %v861 = vsel %vm845, 1, 0
        %v862 = vsel %vm846, 1, 0
        %v863 = vsel %vm847, 1, 0
        %v864 = vsel %vm848, 1, 0
        %v865 = vcvt.s32.f32 %v857
        %v866 = vcvt.s32.f32 %v858
        %v867 = vcvt.s32.f32 %v859
        %v868 = vcvt.s32.f32 %v860
        %v869 = vcvt.s32.f32 %v861
        %v870 = vcvt.s32.f32 %v862
        %v871 = vcvt.s32.f32 %v863
        %v872 = vcvt.s32.f32 %v864
        %v873 = vpack.c.bf16 %v866, %v865
        %v874 = vpack.c.bf16 %v868, %v867
        %v875 = vpack.c.bf16 %v870, %v869
        %v876 = vpack.c.bf16 %v872, %v871
        %877 = vmatprep.subr.bf16.mxu0 0
        %878 = vmatpush1.bf16.msra.mxu0 %v482
        %879 = vmatprep.subr.bf16.mxu0 0
        %880 = vmatpush1.bf16.msra.mxu0 %v483
        %881 = vmatprep.subr.bf16.mxu0 0
        %882 = vmatpush1.bf16.msra.mxu0 %v484
        %883 = vmatprep.subr.bf16.mxu0 0
        %884 = vmatpush1.bf16.msra.mxu0 %v485
        %885 = vmatprep.subr.bf16.mxu0 0
        %886 = vmatpush1.bf16.msra.mxu0 %v486
        %887 = vmatprep.subr.bf16.mxu0 0
        %888 = vmatpush1.bf16.msra.mxu0 %v487
        %889 = vmatprep.subr.bf16.mxu0 0
        %890 = vmatpush1.bf16.msra.mxu0 %v488
        %891 = vmatprep.subr.bf16.mxu0 0
        %892 = vmatpush1.bf16.msra.mxu0 %v489
        %893 = vmatprep.subr.bf16.mxu0 0
        %894 = vmatpush1.bf16.msra.mxu0 0
        %895 = vmatprep.subr.bf16.mxu0 0
        %896 = vmatpush1.bf16.msra.mxu0 0
        %897 = vmatprep.subr.bf16.mxu0 0
        %898 = vmatpush1.bf16.msra.mxu0 0
        %899 = vmatprep.subr.bf16.mxu0 0
        %900 = vmatpush1.bf16.msra.mxu0 0
        %901 = vmatprep.subr.bf16.mxu0 0
        %902 = vmatpush1.bf16.msra.mxu0 0
        %903 = vmatprep.subr.bf16.mxu0 0
        %904 = vmatpush1.bf16.msra.mxu0 0
        %905 = vmatprep.subr.bf16.mxu0 0
        %906 = vmatpush1.bf16.msra.mxu0 0
        %907 = vmatprep.subr.bf16.mxu0 0
        %908 = vmatpush1.bf16.msra.mxu0 0
        %909 = vmatprep.mubr.bf16.mxu0 0
        %910 = vmatmul.mubr.bf16.gmra.mrb[0].mxu0 %v873
        %v911 = vpop.f32.mrb[0].mxu0
        %v912 = vadd.f32 0.0, %v911
        %v913 = vpop.f32.mrb[0].mxu0
        %v914 = vpop.f32.mrb[0].mxu0
        %v915 = vadd.f32 0.0, %v914
        %v916 = vpop.f32.mrb[0].mxu0
        %917 = vmatprep.mubr.bf16.mxu0 0
        %918 = vmatmul.mubr.bf16.gmra.mrb[0].mxu0 %v874
        %v919 = vpop.f32.mrb[0].mxu0
        %v920 = vadd.f32 0.0, %v919
        %v921 = vpop.f32.mrb[0].mxu0
        %v922 = vpop.f32.mrb[0].mxu0
        %v923 = vadd.f32 0.0, %v922
        %v924 = vpop.f32.mrb[0].mxu0
        %925 = vmatprep.mubr.bf16.mxu0 0
        %926 = vmatmul.mubr.bf16.gmra.mrb[0].mxu0 %v875
        %v927 = vpop.f32.mrb[0].mxu0
        %v928 = vadd.f32 0.0, %v927
        %v929 = vpop.f32.mrb[0].mxu0
        %v930 = vpop.f32.mrb[0].mxu0
        %v931 = vadd.f32 0.0, %v930
        %v932 = vpop.f32.mrb[0].mxu0
        %933 = vmatprep.mubr.bf16.mxu0 0
        %934 = vmatmul.mubr.bf16.gmra.mrb[0].mxu0 %v876
        %v935 = vpop.f32.mrb[0].mxu0
        %v936 = vadd.f32 0.0, %v935
        %v937 = vpop.f32.mrb[0].mxu0
        %v938 = vpop.f32.mrb[0].mxu0
        %v939 = vadd.f32 0.0, %v938
        %v940 = vpop.f32.mrb[0].mxu0
        %941 = vdwg.mxu0
        %v942 = vmul.f32 %v912, %v567
        %v943 = vmul.f32 %v915, %v567
        %v944 = vmul.f32 %v920, %v567
        %v945 = vmul.f32 %v923, %v567
        %v946 = vmul.f32 %v928, %v567
        %v947 = vmul.f32 %v931, %v567
        %v948 = vmul.f32 %v936, %v567
        %v949 = vmul.f32 %v939, %v567
        %v950 = vadd.f32 %v942, %v581
        %v951 = vadd.f32 %v943, %v581
        %v952 = vadd.f32 %v944, %v581
        %v953 = vadd.f32 %v945, %v581
        %v954 = vadd.f32 %v946, %v581
        %v955 = vadd.f32 %v947, %v581
        %v956 = vadd.f32 %v948, %v581
        %v957 = vadd.f32 %v949, %v581
        %v958 = vadd.f32 %v809, %v950
        %v959 = vadd.f32 %v810, %v951
        %v960 = vadd.f32 %v811, %v952
        %v961 = vadd.f32 %v812, %v953
        %v962 = vadd.f32 %v813, %v954
        %v963 = vadd.f32 %v814, %v955
        %v964 = vadd.f32 %v815, %v956
        %v965 = vadd.f32 %v816, %v957
        %v966 = vsub.f32 %v958, %v623
        %v967 = vsub.f32 %v959, %v624
        %v968 = vsub.f32 %v960, %v625
        %v969 = vsub.f32 %v961, %v626
        %v970 = vsub.f32 %v962, %v627
        %v971 = vsub.f32 %v963, %v628
        %v972 = vsub.f32 %v964, %v629
        %v973 = vsub.f32 %v965, %v630
        %v974 = vmul.f32 %v966, 0.5
        %v975 = vmul.f32 %v967, 0.5
        %v976 = vmul.f32 %v968, 0.5
        %v977 = vmul.f32 %v969, 0.5
        %v978 = vmul.f32 %v970, 0.5
        %v979 = vmul.f32 %v971, 0.5
        %v980 = vmul.f32 %v972, 0.5
        %v981 = vmul.f32 %v973, 0.5
        %v982 = vadd.f32 %v623, %v974
        %v983 = vadd.f32 %v624, %v975
        %v984 = vadd.f32 %v625, %v976
        %v985 = vadd.f32 %v626, %v977
        %v986 = vadd.f32 %v627, %v978
        %v987 = vadd.f32 %v628, %v979
        %v988 = vadd.f32 %v629, %v980
        %v989 = vadd.f32 %v630, %v981
        %vm990 = vcmp.ge.f32.partialorder %v982, 1.0
        %vm991 = vcmp.ge.f32.partialorder %v983, 1.0
        %vm992 = vcmp.ge.f32.partialorder %v984, 1.0
        %vm993 = vcmp.ge.f32.partialorder %v985, 1.0
        %vm994 = vcmp.ge.f32.partialorder %v986, 1.0
        %vm995 = vcmp.ge.f32.partialorder %v987, 1.0
        %vm996 = vcmp.ge.f32.partialorder %v988, 1.0
        %vm997 = vcmp.ge.f32.partialorder %v989, 1.0
        %v998 = vsel %vm990, 0.0, %v982
        %v999 = vsel %vm991, 0.0, %v983
        %v1000 = vsel %vm992, 0.0, %v984
        %v1001 = vsel %vm993, 0.0, %v985
        %v1002 = vsel %vm994, 0.0, %v986
        %v1003 = vsel %vm995, 0.0, %v987
        %v1004 = vsel %vm996, 0.0, %v988
        %v1005 = vsel %vm997, 0.0, %v989
        %v1006 = vsel %vm990, 1, 0
        %v1007 = vsel %vm991, 1, 0
        %v1008 = vsel %vm992, 1, 0
        %v1009 = vsel %vm993, 1, 0
        %v1010 = vsel %vm994, 1, 0
        %v1011 = vsel %vm995, 1, 0
        %v1012 = vsel %vm996, 1, 0
        %v1013 = vsel %vm997, 1, 0
        %v1014 = vcvt.s32.f32 %v1006
        %v1015 = vcvt.s32.f32 %v1007
        %v1016 = vcvt.s32.f32 %v1008
        %v1017 = vcvt.s32.f32 %v1009
        %v1018 = vcvt.s32.f32 %v1010
        %v1019 = vcvt.s32.f32 %v1011
        %v1020 = vcvt.s32.f32 %v1012
        %v1021 = vcvt.s32.f32 %v1013
        %v1022 = vpack.c.bf16 %v1015, %v1014
        %v1023 = vpack.c.bf16 %v1017, %v1016
        %v1024 = vpack.c.bf16 %v1019, %v1018
        %v1025 = vpack.c.bf16 %v1021, %v1020
        %1026 = vmatprep.subr.bf16.mxu0 0
        %1027 = vmatpush1.bf16.msra.mxu0 %v683
        %1028 = vmatprep.subr.bf16.mxu0 0
        %1029 = vmatpush1.bf16.msra.mxu0 %v684
        %1030 = vmatprep.subr.bf16.mxu0 0
        %1031 = vmatpush1.bf16.msra.mxu0 %v685
        %1032 = vmatprep.subr.bf16.mxu0 0
        %1033 = vmatpush1.bf16.msra.mxu0 %v686
        %1034 = vmatprep.subr.bf16.mxu0 0
        %1035 = vmatpush1.bf16.msra.mxu0 %v687
        %1036 = vmatprep.subr.bf16.mxu0 0
        %1037 = vmatpush1.bf16.msra.mxu0 %v688
        %1038 = vmatprep.subr.bf16.mxu0 0
        %1039 = vmatpush1.bf16.msra.mxu0 %v689
        %1040 = vmatprep.subr.bf16.mxu0 0
        %1041 = vmatpush1.bf16.msra.mxu0 %v690
        %1042 = vmatprep.subr.bf16.mxu0 0
        %1043 = vmatpush1.bf16.msra.mxu0 0
        %1044 = vmatprep.subr.bf16.mxu0 0
        %1045 = vmatpush1.bf16.msra.mxu0 0
        %1046 = vmatprep.subr.bf16.mxu0 0
        %1047 = vmatpush1.bf16.msra.mxu0 0
        %1048 = vmatprep.subr.bf16.mxu0 0
        %1049 = vmatpush1.bf16.msra.mxu0 0
        %1050 = vmatprep.subr.bf16.mxu0 0
        %1051 = vmatpush1.bf16.msra.mxu0 0
        %1052 = vmatprep.subr.bf16.mxu0 0
        %1053 = vmatpush1.bf16.msra.mxu0 0
        %1054 = vmatprep.subr.bf16.mxu0 0
        %1055 = vmatpush1.bf16.msra.mxu0 0
        %1056 = vmatprep.subr.bf16.mxu0 0
        %1057 = vmatpush1.bf16.msra.mxu0 0
        %1058 = vmatprep.mubr.bf16.mxu0 0
        %1059 = vmatmul.mubr.bf16.gmra.mrb[0].mxu0 %v1022
        %v1060 = vpop.f32.mrb[0].mxu0
        %v1061 = vadd.f32 0.0, %v1060
        %v1062 = vpop.f32.mrb[0].mxu0
        %v1063 = vpop.f32.mrb[0].mxu0
        %v1064 = vadd.f32 0.0, %v1063
        %v1065 = vpop.f32.mrb[0].mxu0
        %1066 = vmatprep.mubr.bf16.mxu0 0
        %1067 = vmatmul.mubr.bf16.gmra.mrb[0].mxu0 %v1023
        %v1068 = vpop.f32.mrb[0].mxu0
        %v1069 = vadd.f32 0.0, %v1068
        %v1070 = vpop.f32.mrb[0].mxu0
        %v1071 = vpop.f32.mrb[0].mxu0
        %v1072 = vadd.f32 0.0, %v1071
        %v1073 = vpop.f32.mrb[0].mxu0
        %1074 = vmatprep.mubr.bf16.mxu0 0
        %1075 = vmatmul.mubr.bf16.gmra.mrb[0].mxu0 %v1024
        %v1076 = vpop.f32.mrb[0].mxu0
        %v1077 = vadd.f32 0.0, %v1076
        %v1078 = vpop.f32.mrb[0].mxu0
        %v1079 = vpop.f32.mrb[0].mxu0
        %v1080 = vadd.f32 0.0, %v1079
        %v1081 = vpop.f32.mrb[0].mxu0
        %1082 = vmatprep.mubr.bf16.mxu0 0
        %1083 = vmatmul.mubr.bf16.gmra.mrb[0].mxu0 %v1025
        %v1084 = vpop.f32.mrb[0].mxu0
        %v1085 = vadd.f32 0.0, %v1084
        %v1086 = vpop.f32.mrb[0].mxu0
        %v1087 = vpop.f32.mrb[0].mxu0
        %v1088 = vadd.f32 0.0, %v1087
        %v1089 = vpop.f32.mrb[0].mxu0
        %1090 = vdwg.mxu0
        %v1091 = vmul.f32 %v1061, %v768
        %v1092 = vmul.f32 %v1064, %v768
        %v1093 = vmul.f32 %v1069, %v768
        %v1094 = vmul.f32 %v1072, %v768
        %v1095 = vmul.f32 %v1077, %v768
        %v1096 = vmul.f32 %v1080, %v768
        %v1097 = vmul.f32 %v1085, %v768
        %v1098 = vmul.f32 %v1088, %v768
        %v1099 = vadd.f32 %v1091, %v782
        %v1100 = vadd.f32 %v1092, %v782
        %v1101 = vadd.f32 %v1093, %v782
        %v1102 = vadd.f32 %v1094, %v782
        %v1103 = vadd.f32 %v1095, %v782
        %v1104 = vadd.f32 %v1096, %v782
        %v1105 = vadd.f32 %v1097, %v782
        %v1106 = vadd.f32 %v1098, %v782
        %v1107 = vadd.f32 %v1099, %v958
        %v1108 = vadd.f32 %v1100, %v959
        %v1109 = vadd.f32 %v1101, %v960
        %v1110 = vadd.f32 %v1102, %v961
        %v1111 = vadd.f32 %v1103, %v962
        %v1112 = vadd.f32 %v1104, %v963
        %v1113 = vadd.f32 %v1105, %v964
        %v1114 = vadd.f32 %v1106, %v965
        %s1115 = scalar_lea.vmem %s350, 64 [#allocation8]
        %1116 = vst [vmem:[%s1115] sm:$0xff] %v1107
        %1117 = vst [vmem:[%s1115 + $0x8] sm:$0xff] %v1108
        %1118 = vst [vmem:[%s1115 + $0x10] sm:$0xff] %v1109
        %1119 = vst [vmem:[%s1115 + $0x18] sm:$0xff] %v1110
        %1120 = vst [vmem:[%s1115 + $0x20] sm:$0xff] %v1111
        %1121 = vst [vmem:[%s1115 + $0x28] sm:$0xff] %v1112
        %1122 = vst [vmem:[%s1115 + $0x30] sm:$0xff] %v1113
        %1123 = vst [vmem:[%s1115 + $0x38] sm:$0xff] %v1114
        %s1124 = scalar_lea.vmem %s312, 128 [#allocation2]
        %v1125 = vld [vmem:[%s1124] sm:$0xff]
        %v1126 = vld [vmem:[%s1124 + $0x8] sm:$0xff]
        %v1127 = vld [vmem:[%s1124 + $0x10] sm:$0xff]
        %v1128 = vld [vmem:[%s1124 + $0x18] sm:$0xff]
        %v1129 = vld [vmem:[%s1124 + $0x20] sm:$0xff]
        %v1130 = vld [vmem:[%s1124 + $0x28] sm:$0xff]
        %v1131 = vld [vmem:[%s1124 + $0x30] sm:$0xff]
        %v1132 = vld [vmem:[%s1124 + $0x38] sm:$0xff]
        %v1133 = vsub.f32 %v1125, %v849
        %v1134 = vsub.f32 %v1126, %v850
        %v1135 = vsub.f32 %v1127, %v851
        %v1136 = vsub.f32 %v1128, %v852
        %v1137 = vsub.f32 %v1129, %v853
        %v1138 = vsub.f32 %v1130, %v854
        %v1139 = vsub.f32 %v1131, %v855
        %v1140 = vsub.f32 %v1132, %v856
        %v1141 = vmul.f32 %v1133, 0.5
        %v1142 = vmul.f32 %v1134, 0.5
        %v1143 = vmul.f32 %v1135, 0.5
        %v1144 = vmul.f32 %v1136, 0.5
        %v1145 = vmul.f32 %v1137, 0.5
        %v1146 = vmul.f32 %v1138, 0.5
        %v1147 = vmul.f32 %v1139, 0.5
        %v1148 = vmul.f32 %v1140, 0.5
        %v1149 = vadd.f32 %v849, %v1141
        %v1150 = vadd.f32 %v850, %v1142
        %v1151 = vadd.f32 %v851, %v1143
        %v1152 = vadd.f32 %v852, %v1144
        %v1153 = vadd.f32 %v853, %v1145
        %v1154 = vadd.f32 %v854, %v1146
        %v1155 = vadd.f32 %v855, %v1147
        %v1156 = vadd.f32 %v856, %v1148
        %vm1157 = vcmp.ge.f32.partialorder %v1149, 1.0
        %vm1158 = vcmp.ge.f32.partialorder %v1150, 1.0
        %vm1159 = vcmp.ge.f32.partialorder %v1151, 1.0
        %vm1160 = vcmp.ge.f32.partialorder %v1152, 1.0
        %vm1161 = vcmp.ge.f32.partialorder %v1153, 1.0
        %vm1162 = vcmp.ge.f32.partialorder %v1154, 1.0
        %vm1163 = vcmp.ge.f32.partialorder %v1155, 1.0
        %vm1164 = vcmp.ge.f32.partialorder %v1156, 1.0
        %v1165 = vsel %vm1157, 0.0, %v1149
        %v1166 = vsel %vm1158, 0.0, %v1150
        %v1167 = vsel %vm1159, 0.0, %v1151
        %v1168 = vsel %vm1160, 0.0, %v1152
        %v1169 = vsel %vm1161, 0.0, %v1153
        %v1170 = vsel %vm1162, 0.0, %v1154
        %v1171 = vsel %vm1163, 0.0, %v1155
        %v1172 = vsel %vm1164, 0.0, %v1156
        %v1173 = vsel %vm1157, 1, 0
        %v1174 = vsel %vm1158, 1, 0
        %v1175 = vsel %vm1159, 1, 0
        %v1176 = vsel %vm1160, 1, 0
        %v1177 = vsel %vm1161, 1, 0
        %v1178 = vsel %vm1162, 1, 0
        %v1179 = vsel %vm1163, 1, 0
        %v1180 = vsel %vm1164, 1, 0
        %v1181 = vcvt.s32.f32 %v1173
        %v1182 = vcvt.s32.f32 %v1174
        %v1183 = vcvt.s32.f32 %v1175
        %v1184 = vcvt.s32.f32 %v1176
        %v1185 = vcvt.s32.f32 %v1177
        %v1186 = vcvt.s32.f32 %v1178
        %v1187 = vcvt.s32.f32 %v1179
        %v1188 = vcvt.s32.f32 %v1180
        %v1189 = vpack.c.bf16 %v1182, %v1181
        %v1190 = vpack.c.bf16 %v1184, %v1183
        %v1191 = vpack.c.bf16 %v1186, %v1185
        %v1192 = vpack.c.bf16 %v1188, %v1187
        %1193 = vmatprep.subr.bf16.mxu0 0
        %1194 = vmatpush1.bf16.msra.mxu0 %v482
        %1195 = vmatprep.subr.bf16.mxu0 0
        %1196 = vmatpush1.bf16.msra.mxu0 %v483
        %1197 = vmatprep.subr.bf16.mxu0 0
        %1198 = vmatpush1.bf16.msra.mxu0 %v484
        %1199 = vmatprep.subr.bf16.mxu0 0
        %1200 = vmatpush1.bf16.msra.mxu0 %v485
        %1201 = vmatprep.subr.bf16.mxu0 0
        %1202 = vmatpush1.bf16.msra.mxu0 %v486
        %1203 = vmatprep.subr.bf16.mxu0 0
        %1204 = vmatpush1.bf16.msra.mxu0 %v487
        %1205 = vmatprep.subr.bf16.mxu0 0
        %1206 = vmatpush1.bf16.msra.mxu0 %v488
        %1207 = vmatprep.subr.bf16.mxu0 0
        %1208 = vmatpush1.bf16.msra.mxu0 %v489
        %1209 = vmatprep.subr.bf16.mxu0 0
        %1210 = vmatpush1.bf16.msra.mxu0 0
        %1211 = vmatprep.subr.bf16.mxu0 0
        %1212 = vmatpush1.bf16.msra.mxu0 0
        %1213 = vmatprep.subr.bf16.mxu0 0
        %1214 = vmatpush1.bf16.msra.mxu0 0
        %1215 = vmatprep.subr.bf16.mxu0 0
        %1216 = vmatpush1.bf16.msra.mxu0 0
        %1217 = vmatprep.subr.bf16.mxu0 0
        %1218 = vmatpush1.bf16.msra.mxu0 0
        %1219 = vmatprep.subr.bf16.mxu0 0
        %1220 = vmatpush1.bf16.msra.mxu0 0
        %1221 = vmatprep.subr.bf16.mxu0 0
        %1222 = vmatpush1.bf16.msra.mxu0 0
        %1223 = vmatprep.subr.bf16.mxu0 0
        %1224 = vmatpush1.bf16.msra.mxu0 0
        %1225 = vmatprep.mubr.bf16.mxu0 0
        %1226 = vmatmul.mubr.bf16.gmra.mrb[0].mxu0 %v1189
        %v1227 = vpop.f32.mrb[0].mxu0
        %v1228 = vadd.f32 0.0, %v1227
        %v1229 = vpop.f32.mrb[0].mxu0
        %v1230 = vpop.f32.mrb[0].mxu0
        %v1231 = vadd.f32 0.0, %v1230
        %v1232 = vpop.f32.mrb[0].mxu0
        %1233 = vmatprep.mubr.bf16.mxu0 0
        %1234 = vmatmul.mubr.bf16.gmra.mrb[0].mxu0 %v1190
        %v1235 = vpop.f32.mrb[0].mxu0
        %v1236 = vadd.f32 0.0, %v1235
        %v1237 = vpop.f32.mrb[0].mxu0
        %v1238 = vpop.f32.mrb[0].mxu0
        %v1239 = vadd.f32 0.0, %v1238
        %v1240 = vpop.f32.mrb[0].mxu0
        %1241 = vmatprep.mubr.bf16.mxu0 0
        %1242 = vmatmul.mubr.bf16.gmra.mrb[0].mxu0 %v1191
        %v1243 = vpop.f32.mrb[0].mxu0
        %v1244 = vadd.f32 0.0, %v1243
        %v1245 = vpop.f32.mrb[0].mxu0
        %v1246 = vpop.f32.mrb[0].mxu0
        %v1247 = vadd.f32 0.0, %v1246
        %v1248 = vpop.f32.mrb[0].mxu0
        %1249 = vmatprep.mubr.bf16.mxu0 0
        %1250 = vmatmul.mubr.bf16.gmra.mrb[0].mxu0 %v1192
        %v1251 = vpop.f32.mrb[0].mxu0
        %v1252 = vadd.f32 0.0, %v1251
        %v1253 = vpop.f32.mrb[0].mxu0
        %v1254 = vpop.f32.mrb[0].mxu0
        %v1255 = vadd.f32 0.0, %v1254
        %v1256 = vpop.f32.mrb[0].mxu0
        %1257 = vdwg.mxu0
        %v1258 = vmul.f32 %v1228, %v567
        %v1259 = vmul.f32 %v1231, %v567
        %v1260 = vmul.f32 %v1236, %v567
        %v1261 = vmul.f32 %v1239, %v567
        %v1262 = vmul.f32 %v1244, %v567
        %v1263 = vmul.f32 %v1247, %v567
        %v1264 = vmul.f32 %v1252, %v567
        %v1265 = vmul.f32 %v1255, %v567
        %v1266 = vadd.f32 %v1258, %v581
        %v1267 = vadd.f32 %v1259, %v581
        %v1268 = vadd.f32 %v1260, %v581
        %v1269 = vadd.f32 %v1261, %v581
        %v1270 = vadd.f32 %v1262, %v581
        %v1271 = vadd.f32 %v1263, %v581
        %v1272 = vadd.f32 %v1264, %v581
        %v1273 = vadd.f32 %v1265, %v581
        %v1274 = vadd.f32 %v1125, %v1266
        %v1275 = vadd.f32 %v1126, %v1267
        %v1276 = vadd.f32 %v1127, %v1268
        %v1277 = vadd.f32 %v1128, %v1269
        %v1278 = vadd.f32 %v1129, %v1270
        %v1279 = vadd.f32 %v1130, %v1271
        %v1280 = vadd.f32 %v1131, %v1272
        %v1281 = vadd.f32 %v1132, %v1273
        %v1282 = vsub.f32 %v1274, %v998
        %v1283 = vsub.f32 %v1275, %v999
        %v1284 = vsub.f32 %v1276, %v1000
        %v1285 = vsub.f32 %v1277, %v1001
        %v1286 = vsub.f32 %v1278, %v1002
        %v1287 = vsub.f32 %v1279, %v1003
        %v1288 = vsub.f32 %v1280, %v1004
        %v1289 = vsub.f32 %v1281, %v1005
        %v1290 = vmul.f32 %v1282, 0.5
        %v1291 = vmul.f32 %v1283, 0.5
        %v1292 = vmul.f32 %v1284, 0.5
        %v1293 = vmul.f32 %v1285, 0.5
        %v1294 = vmul.f32 %v1286, 0.5
        %v1295 = vmul.f32 %v1287, 0.5
        %v1296 = vmul.f32 %v1288, 0.5
        %v1297 = vmul.f32 %v1289, 0.5
        %v1298 = vadd.f32 %v998, %v1290
        %v1299 = vadd.f32 %v999, %v1291
        %v1300 = vadd.f32 %v1000, %v1292
        %v1301 = vadd.f32 %v1001, %v1293
        %v1302 = vadd.f32 %v1002, %v1294
        %v1303 = vadd.f32 %v1003, %v1295
        %v1304 = vadd.f32 %v1004, %v1296
        %v1305 = vadd.f32 %v1005, %v1297
        %vm1306 = vcmp.ge.f32.partialorder %v1298, 1.0
        %vm1307 = vcmp.ge.f32.partialorder %v1299, 1.0
        %vm1308 = vcmp.ge.f32.partialorder %v1300, 1.0
        %vm1309 = vcmp.ge.f32.partialorder %v1301, 1.0
        %vm1310 = vcmp.ge.f32.partialorder %v1302, 1.0
        %vm1311 = vcmp.ge.f32.partialorder %v1303, 1.0
        %vm1312 = vcmp.ge.f32.partialorder %v1304, 1.0
        %vm1313 = vcmp.ge.f32.partialorder %v1305, 1.0
        %v1314 = vsel %vm1306, 0.0, %v1298
        %v1315 = vsel %vm1307, 0.0, %v1299
        %v1316 = vsel %vm1308, 0.0, %v1300
        %v1317 = vsel %vm1309, 0.0, %v1301
        %v1318 = vsel %vm1310, 0.0, %v1302
        %v1319 = vsel %vm1311, 0.0, %v1303
        %v1320 = vsel %vm1312, 0.0, %v1304
        %v1321 = vsel %vm1313, 0.0, %v1305
        %v1322 = vsel %vm1306, 1, 0
        %v1323 = vsel %vm1307, 1, 0
        %v1324 = vsel %vm1308, 1, 0
        %v1325 = vsel %vm1309, 1, 0
        %v1326 = vsel %vm1310, 1, 0
        %v1327 = vsel %vm1311, 1, 0
        %v1328 = vsel %vm1312, 1, 0
        %v1329 = vsel %vm1313, 1, 0
        %v1330 = vcvt.s32.f32 %v1322
        %v1331 = vcvt.s32.f32 %v1323
        %v1332 = vcvt.s32.f32 %v1324
        %v1333 = vcvt.s32.f32 %v1325
        %v1334 = vcvt.s32.f32 %v1326
        %v1335 = vcvt.s32.f32 %v1327
        %v1336 = vcvt.s32.f32 %v1328
        %v1337 = vcvt.s32.f32 %v1329
        %v1338 = vpack.c.bf16 %v1331, %v1330
        %v1339 = vpack.c.bf16 %v1333, %v1332
        %v1340 = vpack.c.bf16 %v1335, %v1334
        %v1341 = vpack.c.bf16 %v1337, %v1336
        %1342 = vmatprep.subr.bf16.mxu0 0
        %1343 = vmatpush1.bf16.msra.mxu0 %v683
        %1344 = vmatprep.subr.bf16.mxu0 0
        %1345 = vmatpush1.bf16.msra.mxu0 %v684
        %1346 = vmatprep.subr.bf16.mxu0 0
        %1347 = vmatpush1.bf16.msra.mxu0 %v685
        %1348 = vmatprep.subr.bf16.mxu0 0
        %1349 = vmatpush1.bf16.msra.mxu0 %v686
        %1350 = vmatprep.subr.bf16.mxu0 0
        %1351 = vmatpush1.bf16.msra.mxu0 %v687
        %1352 = vmatprep.subr.bf16.mxu0 0
        %1353 = vmatpush1.bf16.msra.mxu0 %v688
        %1354 = vmatprep.subr.bf16.mxu0 0
        %1355 = vmatpush1.bf16.msra.mxu0 %v689
        %1356 = vmatprep.subr.bf16.mxu0 0
        %1357 = vmatpush1.bf16.msra.mxu0 %v690
        %1358 = vmatprep.subr.bf16.mxu0 0
        %1359 = vmatpush1.bf16.msra.mxu0 0
        %1360 = vmatprep.subr.bf16.mxu0 0
        %1361 = vmatpush1.bf16.msra.mxu0 0
        %1362 = vmatprep.subr.bf16.mxu0 0
        %1363 = vmatpush1.bf16.msra.mxu0 0
        %1364 = vmatprep.subr.bf16.mxu0 0
        %1365 = vmatpush1.bf16.msra.mxu0 0
        %1366 = vmatprep.subr.bf16.mxu0 0
        %1367 = vmatpush1.bf16.msra.mxu0 0
        %1368 = vmatprep.subr.bf16.mxu0 0
        %1369 = vmatpush1.bf16.msra.mxu0 0
        %1370 = vmatprep.subr.bf16.mxu0 0
        %1371 = vmatpush1.bf16.msra.mxu0 0
        %1372 = vmatprep.subr.bf16.mxu0 0
        %1373 = vmatpush1.bf16.msra.mxu0 0
        %1374 = vmatprep.mubr.bf16.mxu0 0
        %1375 = vmatmul.mubr.bf16.gmra.mrb[0].mxu0 %v1338
        %v1376 = vpop.f32.mrb[0].mxu0
        %v1377 = vadd.f32 0.0, %v1376
        %v1378 = vpop.f32.mrb[0].mxu0
        %v1379 = vpop.f32.mrb[0].mxu0
        %v1380 = vadd.f32 0.0, %v1379
        %v1381 = vpop.f32.mrb[0].mxu0
        %1382 = vmatprep.mubr.bf16.mxu0 0
        %1383 = vmatmul.mubr.bf16.gmra.mrb[0].mxu0 %v1339
        %v1384 = vpop.f32.mrb[0].mxu0
        %v1385 = vadd.f32 0.0, %v1384
        %v1386 = vpop.f32.mrb[0].mxu0
        %v1387 = vpop.f32.mrb[0].mxu0
        %v1388 = vadd.f32 0.0, %v1387
        %v1389 = vpop.f32.mrb[0].mxu0
        %1390 = vmatprep.mubr.bf16.mxu0 0
        %1391 = vmatmul.mubr.bf16.gmra.mrb[0].mxu0 %v1340
        %v1392 = vpop.f32.mrb[0].mxu0
        %v1393 = vadd.f32 0.0, %v1392
        %v1394 = vpop.f32.mrb[0].mxu0
        %v1395 = vpop.f32.mrb[0].mxu0
        %v1396 = vadd.f32 0.0, %v1395
        %v1397 = vpop.f32.mrb[0].mxu0
        %1398 = vmatprep.mubr.bf16.mxu0 0
        %1399 = vmatmul.mubr.bf16.gmra.mrb[0].mxu0 %v1341
        %v1400 = vpop.f32.mrb[0].mxu0
        %v1401 = vadd.f32 0.0, %v1400
        %v1402 = vpop.f32.mrb[0].mxu0
        %v1403 = vpop.f32.mrb[0].mxu0
        %v1404 = vadd.f32 0.0, %v1403
        %v1405 = vpop.f32.mrb[0].mxu0
        %1406 = vdwg.mxu0
        %v1407 = vmul.f32 %v1377, %v768
        %v1408 = vmul.f32 %v1380, %v768
        %v1409 = vmul.f32 %v1385, %v768
        %v1410 = vmul.f32 %v1388, %v768
        %v1411 = vmul.f32 %v1393, %v768
        %v1412 = vmul.f32 %v1396, %v768
        %v1413 = vmul.f32 %v1401, %v768
        %v1414 = vmul.f32 %v1404, %v768
        %v1415 = vadd.f32 %v1407, %v782
        %v1416 = vadd.f32 %v1408, %v782
        %v1417 = vadd.f32 %v1409, %v782
        %v1418 = vadd.f32 %v1410, %v782
        %v1419 = vadd.f32 %v1411, %v782
        %v1420 = vadd.f32 %v1412, %v782
        %v1421 = vadd.f32 %v1413, %v782
        %v1422 = vadd.f32 %v1414, %v782
        %v1423 = vadd.f32 %v1415, %v1274
        %v1424 = vadd.f32 %v1416, %v1275
        %v1425 = vadd.f32 %v1417, %v1276
        %v1426 = vadd.f32 %v1418, %v1277
        %v1427 = vadd.f32 %v1419, %v1278
        %v1428 = vadd.f32 %v1420, %v1279
        %v1429 = vadd.f32 %v1421, %v1280
        %v1430 = vadd.f32 %v1422, %v1281
        %s1431 = scalar_lea.vmem %s350, 128 [#allocation8]
        %1432 = vst [vmem:[%s1431] sm:$0xff] %v1423
        %1433 = vst [vmem:[%s1431 + $0x8] sm:$0xff] %v1424
        %1434 = vst [vmem:[%s1431 + $0x10] sm:$0xff] %v1425
        %1435 = vst [vmem:[%s1431 + $0x18] sm:$0xff] %v1426
        %1436 = vst [vmem:[%s1431 + $0x20] sm:$0xff] %v1427
        %1437 = vst [vmem:[%s1431 + $0x28] sm:$0xff] %v1428
        %1438 = vst [vmem:[%s1431 + $0x30] sm:$0xff] %v1429
        %1439 = vst [vmem:[%s1431 + $0x38] sm:$0xff] %v1430
        %s1440 = scalar_lea.vmem %s312, 192 [#allocation2]
        %v1441 = vld [vmem:[%s1440] sm:$0xff]
        %v1442 = vld [vmem:[%s1440 + $0x8] sm:$0xff]
        %v1443 = vld [vmem:[%s1440 + $0x10] sm:$0xff]
        %v1444 = vld [vmem:[%s1440 + $0x18] sm:$0xff]
        %v1445 = vld [vmem:[%s1440 + $0x20] sm:$0xff]
        %v1446 = vld [vmem:[%s1440 + $0x28] sm:$0xff]
        %v1447 = vld [vmem:[%s1440 + $0x30] sm:$0xff]
        %v1448 = vld [vmem:[%s1440 + $0x38] sm:$0xff]
        %v1449 = vsub.f32 %v1441, %v1165
        %v1450 = vsub.f32 %v1442, %v1166
        %v1451 = vsub.f32 %v1443, %v1167
        %v1452 = vsub.f32 %v1444, %v1168
        %v1453 = vsub.f32 %v1445, %v1169
        %v1454 = vsub.f32 %v1446, %v1170
        %v1455 = vsub.f32 %v1447, %v1171
        %v1456 = vsub.f32 %v1448, %v1172
        %v1457 = vmul.f32 %v1449, 0.5
        %v1458 = vmul.f32 %v1450, 0.5
        %v1459 = vmul.f32 %v1451, 0.5
        %v1460 = vmul.f32 %v1452, 0.5
        %v1461 = vmul.f32 %v1453, 0.5
        %v1462 = vmul.f32 %v1454, 0.5
        %v1463 = vmul.f32 %v1455, 0.5
        %v1464 = vmul.f32 %v1456, 0.5
        %v1465 = vadd.f32 %v1165, %v1457
        %v1466 = vadd.f32 %v1166, %v1458
        %v1467 = vadd.f32 %v1167, %v1459
        %v1468 = vadd.f32 %v1168, %v1460
        %v1469 = vadd.f32 %v1169, %v1461
        %v1470 = vadd.f32 %v1170, %v1462
        %v1471 = vadd.f32 %v1171, %v1463
        %v1472 = vadd.f32 %v1172, %v1464
        %vm1473 = vcmp.ge.f32.partialorder %v1465, 1.0
        %vm1474 = vcmp.ge.f32.partialorder %v1466, 1.0
        %vm1475 = vcmp.ge.f32.partialorder %v1467, 1.0
        %vm1476 = vcmp.ge.f32.partialorder %v1468, 1.0
        %vm1477 = vcmp.ge.f32.partialorder %v1469, 1.0
        %vm1478 = vcmp.ge.f32.partialorder %v1470, 1.0
        %vm1479 = vcmp.ge.f32.partialorder %v1471, 1.0
        %vm1480 = vcmp.ge.f32.partialorder %v1472, 1.0
        %v1481 = vsel %vm1473, 1, 0
        %v1482 = vsel %vm1474, 1, 0
        %v1483 = vsel %vm1475, 1, 0
        %v1484 = vsel %vm1476, 1, 0
        %v1485 = vsel %vm1477, 1, 0
        %v1486 = vsel %vm1478, 1, 0
        %v1487 = vsel %vm1479, 1, 0
        %v1488 = vsel %vm1480, 1, 0
        %v1489 = vcvt.s32.f32 %v1481
        %v1490 = vcvt.s32.f32 %v1482
        %v1491 = vcvt.s32.f32 %v1483
        %v1492 = vcvt.s32.f32 %v1484
        %v1493 = vcvt.s32.f32 %v1485
        %v1494 = vcvt.s32.f32 %v1486
        %v1495 = vcvt.s32.f32 %v1487
        %v1496 = vcvt.s32.f32 %v1488
        %v1497 = vpack.c.bf16 %v1490, %v1489
        %v1498 = vpack.c.bf16 %v1492, %v1491
        %v1499 = vpack.c.bf16 %v1494, %v1493
        %v1500 = vpack.c.bf16 %v1496, %v1495
        %1501 = vmatprep.subr.bf16.mxu0 0
        %1502 = vmatpush1.bf16.msra.mxu0 %v482
        %1503 = vmatprep.subr.bf16.mxu0 0
        %1504 = vmatpush1.bf16.msra.mxu0 %v483
        %1505 = vmatprep.subr.bf16.mxu0 0
        %1506 = vmatpush1.bf16.msra.mxu0 %v484
        %1507 = vmatprep.subr.bf16.mxu0 0
        %1508 = vmatpush1.bf16.msra.mxu0 %v485
        %1509 = vmatprep.subr.bf16.mxu0 0
        %1510 = vmatpush1.bf16.msra.mxu0 %v486
        %1511 = vmatprep.subr.bf16.mxu0 0
        %1512 = vmatpush1.bf16.msra.mxu0 %v487
        %1513 = vmatprep.subr.bf16.mxu0 0
        %1514 = vmatpush1.bf16.msra.mxu0 %v488
        %1515 = vmatprep.subr.bf16.mxu0 0
        %1516 = vmatpush1.bf16.msra.mxu0 %v489
        %1517 = vmatprep.subr.bf16.mxu0 0
        %1518 = vmatpush1.bf16.msra.mxu0 0
        %1519 = vmatprep.subr.bf16.mxu0 0
        %1520 = vmatpush1.bf16.msra.mxu0 0
        %1521 = vmatprep.subr.bf16.mxu0 0
        %1522 = vmatpush1.bf16.msra.mxu0 0
        %1523 = vmatprep.subr.bf16.mxu0 0
        %1524 = vmatpush1.bf16.msra.mxu0 0
        %1525 = vmatprep.subr.bf16.mxu0 0
        %1526 = vmatpush1.bf16.msra.mxu0 0
        %1527 = vmatprep.subr.bf16.mxu0 0
        %1528 = vmatpush1.bf16.msra.mxu0 0
        %1529 = vmatprep.subr.bf16.mxu0 0
        %1530 = vmatpush1.bf16.msra.mxu0 0
        %1531 = vmatprep.subr.bf16.mxu0 0
        %1532 = vmatpush1.bf16.msra.mxu0 0
        %1533 = vmatprep.mubr.bf16.mxu0 0
        %1534 = vmatmul.mubr.bf16.gmra.mrb[0].mxu0 %v1497
        %v1535 = vpop.f32.mrb[0].mxu0
        %v1536 = vadd.f32 0.0, %v1535
        %v1537 = vpop.f32.mrb[0].mxu0
        %v1538 = vpop.f32.mrb[0].mxu0
        %v1539 = vadd.f32 0.0, %v1538
        %v1540 = vpop.f32.mrb[0].mxu0
        %1541 = vmatprep.mubr.bf16.mxu0 0
        %1542 = vmatmul.mubr.bf16.gmra.mrb[0].mxu0 %v1498
        %v1543 = vpop.f32.mrb[0].mxu0
        %v1544 = vadd.f32 0.0, %v1543
        %v1545 = vpop.f32.mrb[0].mxu0
        %v1546 = vpop.f32.mrb[0].mxu0
        %v1547 = vadd.f32 0.0, %v1546
        %v1548 = vpop.f32.mrb[0].mxu0
        %1549 = vmatprep.mubr.bf16.mxu0 0
        %1550 = vmatmul.mubr.bf16.gmra.mrb[0].mxu0 %v1499
        %v1551 = vpop.f32.mrb[0].mxu0
        %v1552 = vadd.f32 0.0, %v1551
        %v1553 = vpop.f32.mrb[0].mxu0
        %v1554 = vpop.f32.mrb[0].mxu0
        %v1555 = vadd.f32 0.0, %v1554
        %v1556 = vpop.f32.mrb[0].mxu0
        %1557 = vmatprep.mubr.bf16.mxu0 0
        %1558 = vmatmul.mubr.bf16.gmra.mrb[0].mxu0 %v1500
        %v1559 = vpop.f32.mrb[0].mxu0
        %v1560 = vadd.f32 0.0, %v1559
        %v1561 = vpop.f32.mrb[0].mxu0
        %v1562 = vpop.f32.mrb[0].mxu0
        %v1563 = vadd.f32 0.0, %v1562
        %v1564 = vpop.f32.mrb[0].mxu0
        %1565 = vdwg.mxu0
        %v1566 = vmul.f32 %v1536, %v567
        %v1567 = vmul.f32 %v1539, %v567
        %v1568 = vmul.f32 %v1544, %v567
        %v1569 = vmul.f32 %v1547, %v567
        %v1570 = vmul.f32 %v1552, %v567
        %v1571 = vmul.f32 %v1555, %v567
        %v1572 = vmul.f32 %v1560, %v567
        %v1573 = vmul.f32 %v1563, %v567
        %v1574 = vadd.f32 %v1566, %v581
        %v1575 = vadd.f32 %v1567, %v581
        %v1576 = vadd.f32 %v1568, %v581
        %v1577 = vadd.f32 %v1569, %v581
        %v1578 = vadd.f32 %v1570, %v581
        %v1579 = vadd.f32 %v1571, %v581
        %v1580 = vadd.f32 %v1572, %v581
        %v1581 = vadd.f32 %v1573, %v581
        %v1582 = vadd.f32 %v1441, %v1574
        %v1583 = vadd.f32 %v1442, %v1575
        %v1584 = vadd.f32 %v1443, %v1576
        %v1585 = vadd.f32 %v1444, %v1577
        %v1586 = vadd.f32 %v1445, %v1578
        %v1587 = vadd.f32 %v1446, %v1579
        %v1588 = vadd.f32 %v1447, %v1580
        %v1589 = vadd.f32 %v1448, %v1581
        %v1590 = vsub.f32 %v1582, %v1314
        %v1591 = vsub.f32 %v1583, %v1315
        %v1592 = vsub.f32 %v1584, %v1316
        %v1593 = vsub.f32 %v1585, %v1317
        %v1594 = vsub.f32 %v1586, %v1318
        %v1595 = vsub.f32 %v1587, %v1319
        %v1596 = vsub.f32 %v1588, %v1320
        %v1597 = vsub.f32 %v1589, %v1321
        %v1598 = vmul.f32 %v1590, 0.5
        %v1599 = vmul.f32 %v1591, 0.5
        %v1600 = vmul.f32 %v1592, 0.5
        %v1601 = vmul.f32 %v1593, 0.5
        %v1602 = vmul.f32 %v1594, 0.5
        %v1603 = vmul.f32 %v1595, 0.5
        %v1604 = vmul.f32 %v1596, 0.5
        %v1605 = vmul.f32 %v1597, 0.5
        %v1606 = vadd.f32 %v1314, %v1598
        %v1607 = vadd.f32 %v1315, %v1599
        %v1608 = vadd.f32 %v1316, %v1600
        %v1609 = vadd.f32 %v1317, %v1601
        %v1610 = vadd.f32 %v1318, %v1602
        %v1611 = vadd.f32 %v1319, %v1603
        %v1612 = vadd.f32 %v1320, %v1604
        %v1613 = vadd.f32 %v1321, %v1605
        %vm1614 = vcmp.ge.f32.partialorder %v1606, 1.0
        %vm1615 = vcmp.ge.f32.partialorder %v1607, 1.0
        %vm1616 = vcmp.ge.f32.partialorder %v1608, 1.0
        %vm1617 = vcmp.ge.f32.partialorder %v1609, 1.0
        %vm1618 = vcmp.ge.f32.partialorder %v1610, 1.0
        %vm1619 = vcmp.ge.f32.partialorder %v1611, 1.0
        %vm1620 = vcmp.ge.f32.partialorder %v1612, 1.0
        %vm1621 = vcmp.ge.f32.partialorder %v1613, 1.0
        %v1622 = vsel %vm1614, 1, 0
        %v1623 = vsel %vm1615, 1, 0
        %v1624 = vsel %vm1616, 1, 0
        %v1625 = vsel %vm1617, 1, 0
        %v1626 = vsel %vm1618, 1, 0
        %v1627 = vsel %vm1619, 1, 0
        %v1628 = vsel %vm1620, 1, 0
        %v1629 = vsel %vm1621, 1, 0
        %v1630 = vcvt.s32.f32 %v1622
        %v1631 = vcvt.s32.f32 %v1623
        %v1632 = vcvt.s32.f32 %v1624
        %v1633 = vcvt.s32.f32 %v1625
        %v1634 = vcvt.s32.f32 %v1626
        %v1635 = vcvt.s32.f32 %v1627
        %v1636 = vcvt.s32.f32 %v1628
        %v1637 = vcvt.s32.f32 %v1629
        %v1638 = vpack.c.bf16 %v1631, %v1630
        %v1639 = vpack.c.bf16 %v1633, %v1632
        %v1640 = vpack.c.bf16 %v1635, %v1634
        %v1641 = vpack.c.bf16 %v1637, %v1636
        %1642 = vmatprep.subr.bf16.mxu0 0
        %1643 = vmatpush1.bf16.msra.mxu0 %v683
        %1644 = vmatprep.subr.bf16.mxu0 0
        %1645 = vmatpush1.bf16.msra.mxu0 %v684
        %1646 = vmatprep.subr.bf16.mxu0 0
        %1647 = vmatpush1.bf16.msra.mxu0 %v685
        %1648 = vmatprep.subr.bf16.mxu0 0
        %1649 = vmatpush1.bf16.msra.mxu0 %v686
        %1650 = vmatprep.subr.bf16.mxu0 0
        %1651 = vmatpush1.bf16.msra.mxu0 %v687
        %1652 = vmatprep.subr.bf16.mxu0 0
        %1653 = vmatpush1.bf16.msra.mxu0 %v688
        %1654 = vmatprep.subr.bf16.mxu0 0
        %1655 = vmatpush1.bf16.msra.mxu0 %v689
        %1656 = vmatprep.subr.bf16.mxu0 0
        %1657 = vmatpush1.bf16.msra.mxu0 %v690
        %1658 = vmatprep.subr.bf16.mxu0 0
        %1659 = vmatpush1.bf16.msra.mxu0 0
        %1660 = vmatprep.subr.bf16.mxu0 0
        %1661 = vmatpush1.bf16.msra.mxu0 0
        %1662 = vmatprep.subr.bf16.mxu0 0
        %1663 = vmatpush1.bf16.msra.mxu0 0
        %1664 = vmatprep.subr.bf16.mxu0 0
        %1665 = vmatpush1.bf16.msra.mxu0 0
        %1666 = vmatprep.subr.bf16.mxu0 0
        %1667 = vmatpush1.bf16.msra.mxu0 0
        %1668 = vmatprep.subr.bf16.mxu0 0
        %1669 = vmatpush1.bf16.msra.mxu0 0
        %1670 = vmatprep.subr.bf16.mxu0 0
        %1671 = vmatpush1.bf16.msra.mxu0 0
        %1672 = vmatprep.subr.bf16.mxu0 0
        %1673 = vmatpush1.bf16.msra.mxu0 0
        %1674 = vmatprep.mubr.bf16.mxu0 0
        %1675 = vmatmul.mubr.bf16.gmra.mrb[0].mxu0 %v1638
        %v1676 = vpop.f32.mrb[0].mxu0
        %v1677 = vadd.f32 0.0, %v1676
        %v1678 = vpop.f32.mrb[0].mxu0
        %v1679 = vpop.f32.mrb[0].mxu0
        %v1680 = vadd.f32 0.0, %v1679
        %v1681 = vpop.f32.mrb[0].mxu0
        %1682 = vmatprep.mubr.bf16.mxu0 0
        %1683 = vmatmul.mubr.bf16.gmra.mrb[0].mxu0 %v1639
        %v1684 = vpop.f32.mrb[0].mxu0
        %v1685 = vadd.f32 0.0, %v1684
        %v1686 = vpop.f32.mrb[0].mxu0
        %v1687 = vpop.f32.mrb[0].mxu0
        %v1688 = vadd.f32 0.0, %v1687
        %v1689 = vpop.f32.mrb[0].mxu0
        %1690 = vmatprep.mubr.bf16.mxu0 0
        %1691 = vmatmul.mubr.bf16.gmra.mrb[0].mxu0 %v1640
        %v1692 = vpop.f32.mrb[0].mxu0
        %v1693 = vadd.f32 0.0, %v1692
        %v1694 = vpop.f32.mrb[0].mxu0
        %v1695 = vpop.f32.mrb[0].mxu0
        %v1696 = vadd.f32 0.0, %v1695
        %v1697 = vpop.f32.mrb[0].mxu0
        %1698 = vmatprep.mubr.bf16.mxu0 0
        %1699 = vmatmul.mubr.bf16.gmra.mrb[0].mxu0 %v1641
        %v1700 = vpop.f32.mrb[0].mxu0
        %v1701 = vadd.f32 0.0, %v1700
        %v1702 = vpop.f32.mrb[0].mxu0
        %v1703 = vpop.f32.mrb[0].mxu0
        %v1704 = vadd.f32 0.0, %v1703
        %v1705 = vpop.f32.mrb[0].mxu0
        %1706 = vdwg.mxu0
        %v1707 = vmul.f32 %v1677, %v768
        %v1708 = vmul.f32 %v1680, %v768
        %v1709 = vmul.f32 %v1685, %v768
        %v1710 = vmul.f32 %v1688, %v768
        %v1711 = vmul.f32 %v1693, %v768
        %v1712 = vmul.f32 %v1696, %v768
        %v1713 = vmul.f32 %v1701, %v768
        %v1714 = vmul.f32 %v1704, %v768
        %v1715 = vadd.f32 %v1707, %v782
        %v1716 = vadd.f32 %v1708, %v782
        %v1717 = vadd.f32 %v1709, %v782
        %v1718 = vadd.f32 %v1710, %v782
        %v1719 = vadd.f32 %v1711, %v782
        %v1720 = vadd.f32 %v1712, %v782
        %v1721 = vadd.f32 %v1713, %v782
        %v1722 = vadd.f32 %v1714, %v782
        %v1723 = vadd.f32 %v1715, %v1582
        %v1724 = vadd.f32 %v1716, %v1583
        %v1725 = vadd.f32 %v1717, %v1584
        %v1726 = vadd.f32 %v1718, %v1585
        %v1727 = vadd.f32 %v1719, %v1586
        %v1728 = vadd.f32 %v1720, %v1587
        %v1729 = vadd.f32 %v1721, %v1588
        %v1730 = vadd.f32 %v1722, %v1589
        %s1731 = scalar_lea.vmem %s350, 192 [#allocation8]
        %1732 = vst [vmem:[%s1731] sm:$0xff] %v1723
        %1733 = vst [vmem:[%s1731 + $0x8] sm:$0xff] %v1724
        %1734 = vst [vmem:[%s1731 + $0x10] sm:$0xff] %v1725
        %1735 = vst [vmem:[%s1731 + $0x18] sm:$0xff] %v1726
        %1736 = vst [vmem:[%s1731 + $0x20] sm:$0xff] %v1727
        %1737 = vst [vmem:[%s1731 + $0x28] sm:$0xff] %v1728
        %1738 = vst [vmem:[%s1731 + $0x30] sm:$0xff] %v1729
        %1739 = vst [vmem:[%s1731 + $0x38] sm:$0xff] %v1730
        %s1740 = sand.u32 %s185, 1
        %s1741 = scalar_lea.sflag [#allocation4], %s1740
        %s1742 = sand.u32 %s185, 1
        %s1743 = smul.addr %s1742, 256
        %s1744 = scalar_lea.vmem [#allocation8], %s1743
        // Predicated region
        $region61: #{tpu_custom_call.1} parent=47 // pred_check
          %p1745 = pneg %p195
        $region62: #{tpu_custom_call.1} parent=47 // pred_check_branch
          %1747 = sbr.rel (%p1745) target = $region64
        $region63: #{tpu_custom_call.1} parent=47 // pred_region
          #allocation12 [shape = 'u32[6]{0}', space=smem, size = 0x18, scoped, tag = 'DMA stride descriptor']
          %s1748 = smul.u32 8, %s25
          %s1750 = ssub.s32 4096, 4096
          %1751 = vsyncadd %s1741, %s1750
          %s1752 = smul.addr %s1748, 128
          %s1753 = scalar_lea.hbm %s7, %s1752
          %s1755 = sshll.u32 1, 14
          %s1756 = sxor.u32 4294967295, %s1755
          %s1759 = sshll.u32 7, 18
          %s1760 = sxor.u32 4294967295, %s1759
          %s1761 = sand.u32 0, %s1760
          %s1763 = sor.u32 %s1761, 0
          %s1765 = sshll.u32 3, 24
          %s1766 = sxor.u32 4294967295, %s1765
          %s1767 = sand.u32 %s1763, %s1766
          %s1769 = sor.u32 %s1767, 0
          %s1770 = sshll.u32 %s1744, 4
          %s1771 = int_to_ptr.vmem [resolvable:$true] %s1770
          %1777 = sst [smem:[#allocation12]] 1024
          %s1778 = scalar_lea.smem [#allocation12], 1
          %1779 = sst [smem:[%s1778]] 2048
          %s1780 = scalar_lea.smem [#allocation12], 2
          %1781 = sst [smem:[%s1780]] 8
          %s1782 = scalar_lea.smem [#allocation12], 3
          %1783 = sst [smem:[%s1782]] 128
          %s1784 = scalar_lea.smem [#allocation12], 4
          %1785 = sst [smem:[%s1784]] 128
          %s1786 = scalar_lea.smem [#allocation12], 5
          %1787 = sst [smem:[%s1786]] 8
          %1789 = dma.general %s1771, 4096, %s1753, %s1741, [#allocation11], [#allocation12], %s1769, 0
        $region64: #{tpu_custom_call.1} parent=47 // pred_fallthru
          _
      $region48: #{tpu_custom_call.1} parent=5 // pred_fallthru
        _
      %p1790 = scmp.le.s32.totalorder 2, %s20
      // Predicated region
      $region65: #{tpu_custom_call.1} parent=5 // pred_check
        %p1791 = pneg %p1790
      $region66: #{tpu_custom_call.1} parent=5 // pred_check_branch
        %1793 = sbr.rel (%p1791) target = $region68
      $region67: #{tpu_custom_call.1} parent=5 // pred_region
        %s1794 = ssub.s32 %s20, 2
        // Predicated region
        $region69: #{tpu_custom_call.1} parent=67 // pred_check
          %p1795 = pneg %p201
        $region70: #{tpu_custom_call.1} parent=67 // pred_check_branch
          %1797 = sbr.rel (%p1795) target = $region72
        $region71: #{tpu_custom_call.1} parent=67 // pred_region
          %s1798 = sand.u32 %s186, 1
          %s1799 = scalar_lea.sflag [#allocation4], %s1798
          %s1800 = sand.u32 %s186, 1
          %s1801 = smul.addr %s1800, 256
          %s1802 = scalar_lea.vmem [#allocation8], %s1801
          %1803 = dma.done %s1799, 4096
        $region72: #{tpu_custom_call.1} parent=67 // pred_fallthru
          _
      $region68: #{tpu_custom_call.1} parent=5 // pred_fallthru
        _
    $region6: #{tpu_custom_call.1} parent=1 // loop_footer
      %s24 = sadd.s32 1, %s20
    $region7: #{tpu_custom_call.1} parent=1 // loop_footer_branch
      %19 = sbr.rel target = $region3
    $region8: #{tpu_custom_call.1} parent=1 // loop_exit
      _
    %1804 = vsyncpa [#allocation3], 1
    %s1805 = scalar_lea.sflag [#allocation3], 1
    %1806 = vsyncpa %s1805, 1
    %1807 = vsyncpa [#allocation6], 1
    %1808 = vsyncpa [#allocation4], 1
    %s1809 = scalar_lea.sflag [#allocation4], 1
    %1810 = vsyncpa %s1809, 1

</llo_original>
